<compile_context>
chip_gen: v7x
topology: tpu7x:2x2x1
jax: 0.10.0
libtpu: 0.0.40
codegen_flags: <defaults>
</compile_context>

<pallas_src>
import jax
import jax.numpy as jnp
from jax import lax
from jax.experimental import pallas as pl
from jax.experimental.pallas import tpu as pltpu


def _round_up(n, m):
    return ((n + m - 1) // m) * m


def _cdiv(a, b):
    return (a + b - 1) // b


# --------------------------------------------------------------------------
# Kernel
# --------------------------------------------------------------------------
def motion_kernel(
    tmax_ref,     # (n_tiles,) i32  SMEM scalar prefetch: per-tile max length
    x_ref,        # (T, TB, Din)  bf16  time-major batch tile
    lens_ref,     # (TB, 1)       i32
    w_emb_ref,    # (Din, H)   bf16
    b_emb_ref,    # (1, H)     f32
    w_ih_f_ref,   # (H, 3H)    bf16   forward-direction input->gates
    w_hh_f_ref,   # (H, 3H)    bf16   forward-direction hidden->gates
    b_ih_f_ref,   # (1, 3H)    f32
    b_hh_f_ref,   # (1, 3H)    f32
    w_ih_b_ref,   # (H, 3H)    bf16   backward direction
    w_hh_b_ref,   # (H, 3H)    bf16
    b_ih_b_ref,   # (1, 3H)    f32
    b_hh_b_ref,   # (1, 3H)    f32
    h0_ref,       # (2, H)     f32    learned initial hidden (fwd, bwd)
    w_o1_ref,     # (2H, H)    bf16
    b_o1_ref,     # (1, H)     f32
    ln_g_ref,     # (1, H)     f32
    ln_b_ref,     # (1, H)     f32
    w_o2_ref,     # (H, Dout)  bf16
    b_o2_ref,     # (1, Dout)  f32
    out_ref,      # (TB, Dout) f32
    emb_sc,       # scratch (T, TB, H) bf16
):
    T, TB, Din = x_ref.shape
    H = w_emb_ref.shape[1]
    H3 = 3 * H
    TC = 8 if T % 8 == 0 else (4 if T % 4 == 0 else (2 if T % 2 == 0 else 1))

    w_emb = w_emb_ref[...]            # bf16
    b_emb = b_emb_ref[...]            # f32 (1, H)

    # ---- embedding precompute, chunked over T so the live f32 matmul result
    # and the bf16 x slice are bounded by the chunk (not T*TB rows).
    def emb_chunk(c, carry):
        s = pl.multiple_of(c * TC, TC)
        xc = x_ref[pl.ds(s, TC)].reshape(TC * TB, Din)                 # bf16
        e = jnp.dot(xc, w_emb, preferred_element_type=jnp.float32) + b_emb
        emb_sc[pl.ds(s, TC)] = e.astype(jnp.bfloat16).reshape(TC, TB, H)
        return carry

    lax.fori_loop(0, T // TC, emb_chunk, 0)

    # ---- loop-invariant values hoisted out of the recurrence ----
    # Fold b_ih and the (r, z) part of b_hh into a single per-direction bias.
    # Only the n-gate hidden bias must stay inside the cell (scaled by r).
    col = lax.broadcasted_iota(jnp.int32, (1, H3), 1)
    rz_mask = col < 2 * H
    bias_f = jnp.broadcast_to(
        b_ih_f_ref[...] + jnp.where(rz_mask, b_hh_f_ref[...], 0.0), (TB, H3))
    bias_b = jnp.broadcast_to(
        b_ih_b_ref[...] + jnp.where(rz_mask, b_hh_b_ref[...], 0.0), (TB, H3))
    b_hn_f = jnp.broadcast_to(b_hh_f_ref[...][:, 2 * H:], (TB, H))
    b_hn_b = jnp.broadcast_to(b_hh_b_ref[...][:, 2 * H:], (TB, H))

    lens = lens_ref[...]                               # (TB, 1) i32
    w_ih_f = w_ih_f_ref[...]
    w_hh_f = w_hh_f_ref[...]
    w_ih_b = w_ih_b_ref[...]
    w_hh_b = w_hh_b_ref[...]

    h0 = h0_ref[...]
    h0_f = jnp.broadcast_to(h0[0:1, :], (TB, H)).astype(jnp.float32)
    h0_b = jnp.broadcast_to(h0[1:2, :], (TB, H)).astype(jnp.float32)

    def cell(e_t, bias, h, w_ih, w_hh, b_hn):
        # PyTorch GRU cell, gate order (r, z, n); r applied only to hidden n-term.
        g_i = jnp.dot(e_t, w_ih, preferred_element_type=jnp.float32) + bias
        g_h = jnp.dot(h.astype(jnp.bfloat16), w_hh,
                      preferred_element_type=jnp.float32)
        r = jax.nn.sigmoid(g_i[:, 0:H] + g_h[:, 0:H])
        z = jax.nn.sigmoid(g_i[:, H:2 * H] + g_h[:, H:2 * H])
        n = jnp.tanh(g_i[:, 2 * H:] + r * (g_h[:, 2 * H:] + b_hn))
        return (1.0 - z) * n + z * h

    # Recurrence trip count bounded by this tile's max valid length — padded
    # timesteps past it are fully-masked work and are skipped entirely.
    n_steps = tmax_ref[pl.program_id(0)]

    # ---- fused forward + backward recurrence: two independent chains per
    # iteration so each direction's serial matmul/EUP latency hides the other's.
    def body(i, carry):
        h_f, h_b = carry
        t_b = n_steps - 1 - i
        e_f = emb_sc[i]                                  # (TB, H) bf16
        e_b = emb_sc[t_b]
        hf_new = cell(e_f, bias_f, h_f, w_ih_f, w_hh_f, b_hn_f)
        hb_new = cell(e_b, bias_b, h_b, w_ih_b, w_hh_b, b_hn_b)
        h_f = jnp.where(i < lens, hf_new, h_f)           # freeze once t >= len
        h_b = jnp.where(t_b < lens, hb_new, h_b)
        return (h_f, h_b)

    h_f, h_b = lax.fori_loop(0, n_steps, body, (h0_f, h0_b))

    # ---- output_net: Linear -> LayerNorm -> LeakyReLU(0.2) -> Linear ----
    gru_last = jnp.concatenate([h_f, h_b], axis=-1).astype(jnp.bfloat16)
    y = jnp.dot(gru_last, w_o1_ref[...],
                preferred_element_type=jnp.float32) + b_o1_ref[...]
    mean = jnp.mean(y, axis=-1, keepdims=True)
    var = jnp.mean((y - mean) ** 2, axis=-1, keepdims=True)
    y = (y - mean) * lax.rsqrt(var + 1e-5)
    y = y * ln_g_ref[...] + ln_b_ref[...]
    y = jnp.where(y > 0, y, 0.2 * y).astype(jnp.bfloat16)
    out_ref[...] = (jnp.dot(y, w_o2_ref[...],
                            preferred_element_type=jnp.float32) + b_o2_ref[...])


# --------------------------------------------------------------------------
# VMEM planning (generation-aware)
# --------------------------------------------------------------------------
def _physical_vmem_bytes():
    try:
        info = pltpu.get_tpu_info()
        for name in ("vmem_capacity_bytes", "vmem_bytes", "vmem_size_bytes"):
            v = getattr(info, name, None)
            if v:
                return int(v)
    except Exception:
        pass
    return 64 * 1024 * 1024          # conservative fallback (v7x physical)


def _vmem_estimate_bytes(T, TB, Din, H, Dout, TC):
    f32, bf16 = 4, 2
    lane = lambda n: _round_up(max(n, 1), 128)
    sub8 = lambda n: _round_up(max(n, 1), 8)
    sub16 = lambda n: _round_up(max(n, 1), 16)
    H3 = 3 * H
    # pipelined (double-buffered) blocks: x (bf16), lens, out
    blocks = (2 * T * sub16(TB) * lane(Din) * bf16
              + 2 * sub8(TB) * lane(1) * f32
              + 2 * sub8(TB) * lane(Dout) * f32)
    # resident weights (assume double-buffered by the pipeline — conservative)
    w_bf16 = (sub16(Din) * lane(H)               # w_emb
              + 4 * sub16(H) * lane(H3)          # w_ih_f/b, w_hh_f/b
              + sub16(2 * H) * lane(H)           # w_o1
              + sub16(H) * lane(Dout))           # w_o2
    w_f32 = (sub8(1) * lane(H)                   # b_emb
             + 4 * sub8(1) * lane(H3)            # b_ih / b_hh (f, b)
             + sub8(2) * lane(H)                 # h0
             + 3 * sub8(1) * lane(H)             # b_o1, ln_g, ln_b
             + sub8(1) * lane(Dout))             # b_o2
    weights = 2 * (w_bf16 * bf16 + w_f32 * f32)
    # persistent bf16 embedding scratch
    scratch = T * sub16(TB) * lane(H) * bf16
    # in-kernel temporaries: chunked emb matmul result + x slice, per-step
    # gate/hidden working set, output-head working set
    work = (TC * sub16(TB) * (lane(H) * f32 + lane(Din) * bf16)
            + 10 * sub8(TB) * lane(H3) * f32
            + 6 * sub8(TB) * lane(2 * H) * f32)
    return blocks + weights + scratch + work


# --------------------------------------------------------------------------
# Wrapper
# --------------------------------------------------------------------------
def motion_model_forward(x, m_lens, params, *, batch_tile=None, interpret=False):
    """x: (B, T, Din) batch-first; m_lens: (B,) valid lengths (<= T)."""
    B, T, Din = x.shape
    H = params["w_emb"].shape[1]
    Dout = params["w_o2"].shape[1]

    TC = 8
    T_pad = _round_up(T, TC)

    vmem_phys = _physical_vmem_bytes()
    plan_budget = min(int(vmem_phys * 0.60), 96 * 1024 * 1024)
    vmem_limit = min(int(vmem_phys * 0.80), 112 * 1024 * 1024)

    # Largest batch tile (multiple of 16 for bf16 sublane packing, <=256) that
    # fits the VMEM budget including scratch and in-kernel temporaries.
    max_tb = min(256, _round_up(B, 16))
    if batch_tile is not None:
        tb = max(16, min(_round_up(batch_tile, 16), max_tb))
    else:
        tb = max(16, max_tb)
    while tb > 16 and _vmem_estimate_bytes(T_pad, tb, Din, H, Dout, TC) > plan_budget:
        tb -= 16
    est = _vmem_estimate_bytes(T_pad, tb, Din, H, Dout, TC)
    if est > plan_budget:
        # TODO(synk): for very long sequences, stream x by T-chunks from HBM
        # (memory_space=pl.ANY + manual double-buffered DMA) so VMEM scales
        # with the chunk instead of the full sequence.
        raise ValueError(
            f"MotionModel kernel needs ~{est / 2**20:.1f} MiB VMEM even at "
            f"batch_tile=16; sequence length T={T} is too long for the "
            f"single-tile embedding scratch.")

    # Prefer >=2 batch tiles so the grid can shard across v7x's two
    # TensorCores, as long as each tile keeps a healthy M for the recurrence.
    if batch_tile is None:
        half_tb = _round_up(_cdiv(B, 2), 16)
        if 64 <= half_tb < tb:
            tb = half_tb

    B_pad = _round_up(B, tb)
    n_tiles = B_pad // tb

    # bf16 input, time-major layout so the recurrence indexes the leading axis.
    # TODO(synk): this transpose is one extra HBM round-trip of x; it could be
    # folded into the kernel's input DMA via allow_input_fusion.
    x_tbd = jnp.swapaxes(x.astype(jnp.bfloat16), 0, 1)        # (T, B, Din)
    lens = jnp.minimum(m_lens.astype(jnp.int32), T)
    if T_pad != T or B_pad != B:
        x_tbd = jnp.pad(x_tbd, ((0, T_pad - T), (0, B_pad - B), (0, 0)))
    if B_pad != B:
        lens = jnp.pad(lens, (0, B_pad - B), constant_values=1)
    lens2 = lens.reshape(B_pad, 1)
    # Per-tile max length (scalar-prefetched) bounds the recurrence trip count.
    tile_max = jnp.max(lens.reshape(n_tiles, tb), axis=1).astype(jnp.int32)

    weight_names = ["w_emb", "b_emb", "w_ih_f", "w_hh_f", "b_ih_f", "b_hh_f",
                    "w_ih_b", "w_hh_b", "b_ih_b", "b_hh_b", "h0",
                    "w_o1", "b_o1", "ln_g", "ln_b", "w_o2", "b_o2"]
    bf16_names = {"w_emb", "w_ih_f", "w_hh_f", "w_ih_b", "w_hh_b", "w_o1", "w_o2"}
    weights = [params[k].astype(jnp.bfloat16 if k in bf16_names else jnp.float32)
               for k in weight_names]

    def const_spec(a):
        nd = a.ndim
        return pl.BlockSpec(a.shape, lambda i, tm, _nd=nd: (0,) * _nd)

    # TODO(synk): single-buffer the constant weight inputs (whole-array VMEM
    # placement or pl.Buffered(1)) to reclaim the redundant second copy
    # (~8 MiB bf16 at H=512) — kept default-pipelined here for robustness.
    grid_spec = pltpu.PrefetchScalarGridSpec(
        num_scalar_prefetch=1,
        grid=(n_tiles,),
        in_specs=[
            pl.BlockSpec((T_pad, tb, Din), lambda i, tm: (0, i, 0)),   # x tile
            pl.BlockSpec((tb, 1), lambda i, tm: (i, 0)),               # lens tile
        ] + [const_spec(w) for w in weights],                          # weights
        out_specs=pl.BlockSpec((tb, Dout), lambda i, tm: (i, 0)),
        scratch_shapes=[pltpu.VMEM((T_pad, tb, H), jnp.bfloat16)],     # emb
    )

    out = pl.pallas_call(
        motion_kernel,
        out_shape=jax.ShapeDtypeStruct((B_pad, Dout), jnp.float32),
        grid_spec=grid_spec,
        compiler_params=pltpu.CompilerParams(
            # batch tiles are independent; allow sharding across TensorCores
            dimension_semantics=("parallel",),
            vmem_limit_bytes=vmem_limit,
        ),
        interpret=interpret,
    )(tile_max, x_tbd, lens2, *weights)
    return out[:B]


# --------------------------------------------------------------------------
# Pure-JAX reference. use_bf16=False => plain f32 (PyTorch semantics);
# use_bf16=True => mirrors the kernel's bf16 matmul-operand casts exactly.
# --------------------------------------------------------------------------
def motion_model_reference(x, m_lens, params, use_bf16=False):
    B, T, Din = x.shape
    H = params["w_emb"].shape[1]
    c = (lambda a: a.astype(jnp.bfloat16)) if use_bf16 else (lambda a: a)

    lens = m_lens.astype(jnp.int32)[:, None]                  # (B, 1)

    emb = (jnp.dot(c(x), c(params["w_emb"]), preferred_element_type=jnp.float32)
           + params["b_emb"])                                  # (B, T, H) f32
    emb = c(emb)                                               # kernel stores bf16

    col = jnp.arange(3 * H)[None, :]
    rz_mask = col < 2 * H
    bias_f = params["b_ih_f"] + jnp.where(rz_mask, params["b_hh_f"], 0.0)
    bias_b = params["b_ih_b"] + jnp.where(rz_mask, params["b_hh_b"], 0.0)
    b_hn_f = params["b_hh_f"][:, 2 * H:]
    b_hn_b = params["b_hh_b"][:, 2 * H:]

    def cell(e_t, bias, h, w_ih, w_hh, b_hn):
        g_i = jnp.dot(c(e_t), c(w_ih), preferred_element_type=jnp.float32) + bias
        g_h = jnp.dot(c(h), c(w_hh), preferred_element_type=jnp.float32)
        r = jax.nn.sigmoid(g_i[:, :H] + g_h[:, :H])
        z = jax.nn.sigmoid(g_i[:, H:2 * H] + g_h[:, H:2 * H])
        n = jnp.tanh(g_i[:, 2 * H:] + r * (g_h[:, 2 * H:] + b_hn))
        return (1.0 - z) * n + z * h

    h_f = jnp.broadcast_to(params["h0"][0:1], (B, H)).astype(jnp.float32)
    for t in range(T):
        h_new = cell(emb[:, t, :], bias_f, h_f,
                     params["w_ih_f"], params["w_hh_f"], b_hn_f)
        h_f = jnp.where(t < lens, h_new, h_f)

    h_b = jnp.broadcast_to(params["h0"][1:2], (B, H)).astype(jnp.float32)
    for t in reversed(range(T)):
        h_new = cell(emb[:, t, :], bias_b, h_b,
                     params["w_ih_b"], params["w_hh_b"], b_hn_b)
        h_b = jnp.where(t < lens, h_new, h_b)

    gru_last = jnp.concatenate([h_f, h_b], axis=-1)
    y = jnp.dot(c(gru_last), c(params["w_o1"]),
                preferred_element_type=jnp.float32) + params["b_o1"]
    mean = jnp.mean(y, axis=-1, keepdims=True)
    var = jnp.mean((y - mean) ** 2, axis=-1, keepdims=True)
    y = (y - mean) * lax.rsqrt(var + 1e-5)
    y = y * params["ln_g"] + params["ln_b"]
    y = jnp.where(y > 0, y, 0.2 * y)
    return (jnp.dot(c(y), c(params["w_o2"]),
                    preferred_element_type=jnp.float32) + params["b_o2"])


def init_params(key, input_size, hidden_size, output_size):
    ks = jax.random.split(key, 20)
    s = 0.1
    H = hidden_size

    def n(k, shape):
        return jax.random.normal(k, shape, dtype=jnp.float32) * s

    return {
        "w_emb": n(ks[0], (input_size, H)),
        "b_emb": n(ks[1], (1, H)),
        "w_ih_f": n(ks[2], (H, 3 * H)),
        "w_hh_f": n(ks[3], (H, 3 * H)),
        "b_ih_f": n(ks[4], (1, 3 * H)),
        "b_hh_f": n(ks[5], (1, 3 * H)),
        "w_ih_b": n(ks[6], (H, 3 * H)),
        "w_hh_b": n(ks[7], (H, 3 * H)),
        "b_ih_b": n(ks[8], (1, 3 * H)),
        "b_hh_b": n(ks[9], (1, 3 * H)),
        "h0": jax.random.normal(ks[10], (2, H), dtype=jnp.float32),  # nn.Parameter randn
        "w_o1": n(ks[11], (2 * H, H)),
        "b_o1": n(ks[12], (1, H)),
        "ln_g": jnp.ones((1, H), jnp.float32),
        "ln_b": jnp.zeros((1, H), jnp.float32),
        "w_o2": n(ks[13], (H, output_size)),
        "b_o2": n(ks[14], (1, output_size)),
    }


if __name__ == "__main__":
    # Small synthetic shapes consistent with the module's forward
    # (real module defaults: input_size=259, hidden=512, output=512).
    B, T, Din, H, Dout = 2, 8, 32, 32, 32

    key = jax.random.PRNGKey(0)
    k_param, k_x = jax.random.split(key)
    params = init_params(k_param, Din, H, Dout)

    x = jax.random.normal(k_x, (B, T, Din), dtype=jnp.float32)
    # pack_padded_sequence requires lengths sorted in decreasing order.
    m_lens = jnp.array([T, T - 3], dtype=jnp.int32)

    out = jax.block_until_ready(motion_model_forward(x, m_lens, params))
    assert out.shape == (B, Dout)

    # Tight semantic check against a reference using the *same* bf16 casts
    # (verifies masking / gate math under identical numerics) ...
    ref_bf16 = jax.block_until_ready(
        motion_model_reference(x, m_lens, params, use_bf16=True))
    assert jnp.allclose(out, ref_bf16, atol=2e-3, rtol=2e-3), (
        f"bf16-matched max abs err {jnp.max(jnp.abs(out - ref_bf16))}")

    # ... plus a looser check against the pure-f32 PyTorch-equivalent reference
    # (documents the overall bf16 MXU rounding through the recurrence).
    ref_f32 = jax.block_until_ready(
        motion_model_reference(x, m_lens, params, use_bf16=False))
    assert jnp.allclose(out, ref_f32, atol=5e-2, rtol=5e-2), (
        f"f32 max abs err {jnp.max(jnp.abs(out - ref_f32))}")

    print("KERNEL_OK")
</pallas_src>

<mosaic_0001>
module attributes {stable_mosaic.version = 11 : i64} {
  func.func @motion_kernel(%arg0: i32, %arg1: memref<1xi32, #tpu.memory_space<smem>>, %arg2: memref<8x16x32xbf16, #tpu.memory_space<vmem>>, %arg3: memref<16x1xi32, #tpu.memory_space<vmem>>, %arg4: memref<32x32xbf16, #tpu.memory_space<vmem>>, %arg5: memref<1x32xf32, #tpu.memory_space<vmem>>, %arg6: memref<32x96xbf16, #tpu.memory_space<vmem>>, %arg7: memref<32x96xbf16, #tpu.memory_space<vmem>>, %arg8: memref<1x96xf32, #tpu.memory_space<vmem>>, %arg9: memref<1x96xf32, #tpu.memory_space<vmem>>, %arg10: memref<32x96xbf16, #tpu.memory_space<vmem>>, %arg11: memref<32x96xbf16, #tpu.memory_space<vmem>>, %arg12: memref<1x96xf32, #tpu.memory_space<vmem>>, %arg13: memref<1x96xf32, #tpu.memory_space<vmem>>, %arg14: memref<2x32xf32, #tpu.memory_space<vmem>>, %arg15: memref<64x32xbf16, #tpu.memory_space<vmem>>, %arg16: memref<1x32xf32, #tpu.memory_space<vmem>>, %arg17: memref<1x32xf32, #tpu.memory_space<vmem>>, %arg18: memref<1x32xf32, #tpu.memory_space<vmem>>, %arg19: memref<32x32xbf16, #tpu.memory_space<vmem>>, %arg20: memref<1x32xf32, #tpu.memory_space<vmem>>, %arg21: memref<16x32xf32, #tpu.memory_space<vmem>>, %arg22: memref<8x16x32xbf16, #tpu.memory_space<vmem>>) attributes {dimension_semantics = [#tpu.dimension_semantics<parallel>], iteration_bounds = array<i64: 1>, scalar_prefetch = 1 : i64, scratch_operands = 1 : i64, tpu.core_type = #tpu.core_type<tc>, window_params = [{transform_indices = @transform_0, window_bounds = array<i64: 8, 16, 32>}, {transform_indices = @transform_1, window_bounds = array<i64: 16, 1>}, {pipeline_mode = #tpu.pipeline_mode<synchronous>, transform_indices = @transform_2, window_bounds = array<i64: 32, 32>}, {pipeline_mode = #tpu.pipeline_mode<synchronous>, transform_indices = @transform_3, window_bounds = array<i64: 1, 32>}, {pipeline_mode = #tpu.pipeline_mode<synchronous>, transform_indices = @transform_4, window_bounds = array<i64: 32, 96>}, {pipeline_mode = #tpu.pipeline_mode<synchronous>, transform_indices = @transform_5, window_bounds = array<i64: 32, 96>}, {pipeline_mode = #tpu.pipeline_mode<synchronous>, transform_indices = @transform_6, window_bounds = array<i64: 1, 96>}, {pipeline_mode = #tpu.pipeline_mode<synchronous>, transform_indices = @transform_7, window_bounds = array<i64: 1, 96>}, {pipeline_mode = #tpu.pipeline_mode<synchronous>, transform_indices = @transform_8, window_bounds = array<i64: 32, 96>}, {pipeline_mode = #tpu.pipeline_mode<synchronous>, transform_indices = @transform_9, window_bounds = array<i64: 32, 96>}, {pipeline_mode = #tpu.pipeline_mode<synchronous>, transform_indices = @transform_10, window_bounds = array<i64: 1, 96>}, {pipeline_mode = #tpu.pipeline_mode<synchronous>, transform_indices = @transform_11, window_bounds = array<i64: 1, 96>}, {pipeline_mode = #tpu.pipeline_mode<synchronous>, transform_indices = @transform_12, window_bounds = array<i64: 2, 32>}, {pipeline_mode = #tpu.pipeline_mode<synchronous>, transform_indices = @transform_13, window_bounds = array<i64: 64, 32>}, {pipeline_mode = #tpu.pipeline_mode<synchronous>, transform_indices = @transform_14, window_bounds = array<i64: 1, 32>}, {pipeline_mode = #tpu.pipeline_mode<synchronous>, transform_indices = @transform_15, window_bounds = array<i64: 1, 32>}, {pipeline_mode = #tpu.pipeline_mode<synchronous>, transform_indices = @transform_16, window_bounds = array<i64: 1, 32>}, {pipeline_mode = #tpu.pipeline_mode<synchronous>, transform_indices = @transform_17, window_bounds = array<i64: 32, 32>}, {pipeline_mode = #tpu.pipeline_mode<synchronous>, transform_indices = @transform_18, window_bounds = array<i64: 1, 32>}, {transform_indices = @transform_19, window_bounds = array<i64: 16, 32>}]} {
    %c0 = arith.constant 0 : index
    %c0_0 = arith.constant 0 : index
    %0 = vector.load %arg4[%c0, %c0_0] : memref<32x32xbf16, #tpu.memory_space<vmem>>, vector<32x32xbf16>
    %c0_1 = arith.constant 0 : index
    %c0_2 = arith.constant 0 : index
    %1 = vector.load %arg5[%c0_1, %c0_2] : memref<1x32xf32, #tpu.memory_space<vmem>>, vector<1x32xf32>
    %c0_i32 = arith.constant 0 : i32
    %c8_i32 = arith.constant 8 : i32
    %2 = arith.muli %c0_i32, %c8_i32 : i32
    %3 = tpu.assume_multiple %2, 8 : i32
    %4 = arith.index_cast %3 : i32 to index
    %c0_3 = arith.constant 0 : index
    %c0_4 = arith.constant 0 : index
    %5 = vector.load %arg2[%4, %c0_3, %c0_4] : memref<8x16x32xbf16, #tpu.memory_space<vmem>>, vector<8x16x32xbf16>
    %6 = vector.shape_cast %5 : vector<8x16x32xbf16> to vector<128x32xbf16>
    %cst = arith.constant dense<0.000000e+00> : vector<128x32xf32>
    %7 = tpu.matmul %6, %0, %cst {dimension_numbers = #tpu.dot_dimension_numbers<[1], [0], [0], [1], [0, 0, 1, 1], [], []>} : vector<128x32xbf16>, vector<32x32xbf16>, vector<128x32xf32> -> vector<128x32xf32>
    %8 = vector.broadcast %1 : vector<1x32xf32> to vector<128x32xf32>
    %9 = arith.addf %7, %8 : vector<128x32xf32>
    %10 = arith.truncf %9 : vector<128x32xf32> to vector<128x32xbf16>
    %11 = vector.shape_cast %10 : vector<128x32xbf16> to vector<8x16x32xbf16>
    %12 = arith.index_cast %3 : i32 to index
    %c0_5 = arith.constant 0 : index
    %c0_6 = arith.constant 0 : index
    %13 = vector.load %arg22[%12, %c0_5, %c0_6] : memref<8x16x32xbf16, #tpu.memory_space<vmem>>, vector<8x16x32xbf16>
    tpu.vector_store %arg22[%12, %c0_5, %c0_6], %11 {strides = array<i32>} : memref<8x16x32xbf16, #tpu.memory_space<vmem>>, vector<8x16x32xbf16>,
    %c1_i32 = arith.constant 1 : i32
    %14 = tpu.iota {dimensions = array<i32: 1>} : vector<1x96xi32>
    %c64_i32 = arith.constant 64 : i32
    %15 = vector.broadcast %c64_i32 : i32 to vector<1x96xi32>
    %16 = arith.cmpi slt, %14, %15 : vector<1x96xi32>
    %c0_7 = arith.constant 0 : index
    %c0_8 = arith.constant 0 : index
    %17 = vector.load %arg8[%c0_7, %c0_8] : memref<1x96xf32, #tpu.memory_space<vmem>>, vector<1x96xf32>
    %c0_9 = arith.constant 0 : index
    %c0_10 = arith.constant 0 : index
    %18 = vector.load %arg9[%c0_9, %c0_10] : memref<1x96xf32, #tpu.memory_space<vmem>>, vector<1x96xf32>
    %cst_11 = arith.constant 0.000000e+00 : f32
    %19 = vector.broadcast %cst_11 : f32 to vector<1x96xf32>
    %20 = arith.select %16, %18, %19 : vector<1x96xi1>, vector<1x96xf32>
    %21 = arith.addf %17, %20 : vector<1x96xf32>
    %22 = vector.shape_cast %21 : vector<1x96xf32> to vector<1x96xf32>
    %23 = vector.broadcast %22 : vector<1x96xf32> to vector<16x96xf32>
    %c0_12 = arith.constant 0 : index
    %c0_13 = arith.constant 0 : index
    %24 = vector.load %arg12[%c0_12, %c0_13] : memref<1x96xf32, #tpu.memory_space<vmem>>, vector<1x96xf32>
    %c0_14 = arith.constant 0 : index
    %c0_15 = arith.constant 0 : index
    %25 = vector.load %arg13[%c0_14, %c0_15] : memref<1x96xf32, #tpu.memory_space<vmem>>, vector<1x96xf32>
    %cst_16 = arith.constant 0.000000e+00 : f32
    %26 = vector.broadcast %cst_16 : f32 to vector<1x96xf32>
    %27 = arith.select %16, %25, %26 : vector<1x96xi1>, vector<1x96xf32>
    %28 = arith.addf %24, %27 : vector<1x96xf32>
    %29 = vector.shape_cast %28 : vector<1x96xf32> to vector<1x96xf32>
    %30 = vector.broadcast %29 : vector<1x96xf32> to vector<16x96xf32>
    %c0_17 = arith.constant 0 : index
    %c0_18 = arith.constant 0 : index
    %31 = vector.load %arg9[%c0_17, %c0_18] : memref<1x96xf32, #tpu.memory_space<vmem>>, vector<1x96xf32>
    %32 = vector.extract_strided_slice %31 {offsets = [0, 64], sizes = [1, 32], strides = [1, 1]} : vector<1x96xf32> to vector<1x32xf32>
    %33 = vector.shape_cast %32 : vector<1x32xf32> to vector<1x32xf32>
    %34 = vector.broadcast %33 : vector<1x32xf32> to vector<16x32xf32>
    %c0_19 = arith.constant 0 : index
    %c0_20 = arith.constant 0 : index
    %35 = vector.load %arg13[%c0_19, %c0_20] : memref<1x96xf32, #tpu.memory_space<vmem>>, vector<1x96xf32>
    %36 = vector.extract_strided_slice %35 {offsets = [0, 64], sizes = [1, 32], strides = [1, 1]} : vector<1x96xf32> to vector<1x32xf32>
    %37 = vector.shape_cast %36 : vector<1x32xf32> to vector<1x32xf32>
    %38 = vector.broadcast %37 : vector<1x32xf32> to vector<16x32xf32>
    %c0_21 = arith.constant 0 : index
    %c0_22 = arith.constant 0 : index
    %39 = vector.load %arg3[%c0_21, %c0_22] : memref<16x1xi32, #tpu.memory_space<vmem>>, vector<16x1xi32>
    %c0_23 = arith.constant 0 : index
    %c0_24 = arith.constant 0 : index
    %40 = vector.load %arg6[%c0_23, %c0_24] : memref<32x96xbf16, #tpu.memory_space<vmem>>, vector<32x96xbf16>
    %c0_25 = arith.constant 0 : index
    %c0_26 = arith.constant 0 : index
    %41 = vector.load %arg7[%c0_25, %c0_26] : memref<32x96xbf16, #tpu.memory_space<vmem>>, vector<32x96xbf16>
    %c0_27 = arith.constant 0 : index
    %c0_28 = arith.constant 0 : index
    %42 = vector.load %arg10[%c0_27, %c0_28] : memref<32x96xbf16, #tpu.memory_space<vmem>>, vector<32x96xbf16>
    %c0_29 = arith.constant 0 : index
    %c0_30 = arith.constant 0 : index
    %43 = vector.load %arg11[%c0_29, %c0_30] : memref<32x96xbf16, #tpu.memory_space<vmem>>, vector<32x96xbf16>
    %c0_31 = arith.constant 0 : index
    %c0_32 = arith.constant 0 : index
    %44 = vector.load %arg14[%c0_31, %c0_32] : memref<2x32xf32, #tpu.memory_space<vmem>>, vector<2x32xf32>
    %45 = vector.extract_strided_slice %44 {offsets = [0, 0], sizes = [1, 32], strides = [1, 1]} : vector<2x32xf32> to vector<1x32xf32>
    %46 = vector.shape_cast %45 : vector<1x32xf32> to vector<1x32xf32>
    %47 = vector.broadcast %46 : vector<1x32xf32> to vector<16x32xf32>
    %48 = vector.extract_strided_slice %44 {offsets = [1, 0], sizes = [1, 32], strides = [1, 1]} : vector<2x32xf32> to vector<1x32xf32>
    %49 = vector.shape_cast %48 : vector<1x32xf32> to vector<1x32xf32>
    %50 = vector.broadcast %49 : vector<1x32xf32> to vector<16x32xf32>
    %51 = arith.index_cast %arg0 : i32 to index
    %52 = memref.load %arg1[%51] : memref<1xi32, #tpu.memory_space<smem>>
    %c0_i32_33 = arith.constant 0 : i32
    %53 = arith.subi %52, %c0_i32_33 : i32
    %54 = arith.addi %c0_i32_33, %53 : i32
    %c1_i32_34 = arith.constant 1 : i32
    %55:2 = scf.for %arg23 = %c0_i32_33 to %54 step %c1_i32_34 iter_args(%arg24 = %47, %arg25 = %50) -> (vector<16x32xf32>, vector<16x32xf32>)  : i32 {
      %c1_i32_58 = arith.constant 1 : i32
      %99 = arith.subi %52, %c1_i32_58 : i32
      %100 = arith.subi %99, %arg23 : i32
      %101 = arith.index_cast %arg23 : i32 to index
      %c0_59 = arith.constant 0 : index
      %c0_60 = arith.constant 0 : index
      %102 = vector.load %arg22[%101, %c0_59, %c0_60] : memref<8x16x32xbf16, #tpu.memory_space<vmem>>, vector<1x16x32xbf16>
      %103 = vector.shape_cast %102 : vector<1x16x32xbf16> to vector<16x32xbf16>
      %104 = arith.index_cast %100 : i32 to index
      %c0_61 = arith.constant 0 : index
      %c0_62 = arith.constant 0 : index
      %105 = vector.load %arg22[%104, %c0_61, %c0_62] : memref<8x16x32xbf16, #tpu.memory_space<vmem>>, vector<1x16x32xbf16>
      %106 = vector.shape_cast %105 : vector<1x16x32xbf16> to vector<16x32xbf16>
      %cst_63 = arith.constant dense<0.000000e+00> : vector<16x96xf32>
      %107 = tpu.matmul %103, %40, %cst_63 {dimension_numbers = #tpu.dot_dimension_numbers<[1], [0], [0], [1], [0, 0, 1, 1], [], []>} : vector<16x32xbf16>, vector<32x96xbf16>, vector<16x96xf32> -> vector<16x96xf32>
      %108 = arith.addf %107, %23 : vector<16x96xf32>
      %109 = arith.truncf %arg24 : vector<16x32xf32> to vector<16x32xbf16>
      %cst_64 = arith.constant dense<0.000000e+00> : vector<16x96xf32>
      %110 = tpu.matmul %109, %41, %cst_64 {dimension_numbers = #tpu.dot_dimension_numbers<[1], [0], [0], [1], [0, 0, 1, 1], [], []>} : vector<16x32xbf16>, vector<32x96xbf16>, vector<16x96xf32> -> vector<16x96xf32>
      %111 = vector.extract_strided_slice %108 {offsets = [0, 0], sizes = [16, 32], strides = [1, 1]} : vector<16x96xf32> to vector<16x32xf32>
      %112 = vector.extract_strided_slice %110 {offsets = [0, 0], sizes = [16, 32], strides = [1, 1]} : vector<16x96xf32> to vector<16x32xf32>
      %113 = arith.addf %111, %112 : vector<16x32xf32>
      %114 = arith.negf %113 : vector<16x32xf32>
      %115 = math.exp %114 : vector<16x32xf32>
      %cst_65 = arith.constant 1.000000e+00 : f32
      %116 = vector.broadcast %cst_65 : f32 to vector<16x32xf32>
      %117 = arith.addf %116, %115 : vector<16x32xf32>
      %118 = arith.divf %116, %117 : vector<16x32xf32>
      %119 = vector.extract_strided_slice %108 {offsets = [0, 32], sizes = [16, 32], strides = [1, 1]} : vector<16x96xf32> to vector<16x32xf32>
      %120 = vector.extract_strided_slice %110 {offsets = [0, 32], sizes = [16, 32], strides = [1, 1]} : vector<16x96xf32> to vector<16x32xf32>
      %121 = arith.addf %119, %120 : vector<16x32xf32>
      %122 = arith.negf %121 : vector<16x32xf32>
      %123 = math.exp %122 : vector<16x32xf32>
      %cst_66 = arith.constant 1.000000e+00 : f32
      %124 = vector.broadcast %cst_66 : f32 to vector<16x32xf32>
      %125 = arith.addf %124, %123 : vector<16x32xf32>
      %126 = arith.divf %124, %125 : vector<16x32xf32>
      %127 = vector.extract_strided_slice %108 {offsets = [0, 64], sizes = [16, 32], strides = [1, 1]} : vector<16x96xf32> to vector<16x32xf32>
      %128 = vector.extract_strided_slice %110 {offsets = [0, 64], sizes = [16, 32], strides = [1, 1]} : vector<16x96xf32> to vector<16x32xf32>
      %129 = arith.addf %128, %34 : vector<16x32xf32>
      %130 = arith.mulf %118, %129 : vector<16x32xf32>
      %131 = arith.addf %127, %130 : vector<16x32xf32>
      %132 = math.tanh %131 : vector<16x32xf32>
      %cst_67 = arith.constant 1.000000e+00 : f32
      %133 = vector.broadcast %cst_67 : f32 to vector<16x32xf32>
      %134 = arith.subf %133, %126 : vector<16x32xf32>
      %135 = arith.mulf %134, %132 : vector<16x32xf32>
      %136 = arith.mulf %126, %arg24 : vector<16x32xf32>
      %137 = arith.addf %135, %136 : vector<16x32xf32>
      %cst_68 = arith.constant dense<0.000000e+00> : vector<16x96xf32>
      %138 = tpu.matmul %106, %42, %cst_68 {dimension_numbers = #tpu.dot_dimension_numbers<[1], [0], [0], [1], [0, 0, 1, 1], [], []>} : vector<16x32xbf16>, vector<32x96xbf16>, vector<16x96xf32> -> vector<16x96xf32>
      %139 = arith.addf %138, %30 : vector<16x96xf32>
      %140 = arith.truncf %arg25 : vector<16x32xf32> to vector<16x32xbf16>
      %cst_69 = arith.constant dense<0.000000e+00> : vector<16x96xf32>
      %141 = tpu.matmul %140, %43, %cst_69 {dimension_numbers = #tpu.dot_dimension_numbers<[1], [0], [0], [1], [0, 0, 1, 1], [], []>} : vector<16x32xbf16>, vector<32x96xbf16>, vector<16x96xf32> -> vector<16x96xf32>
      %142 = vector.extract_strided_slice %139 {offsets = [0, 0], sizes = [16, 32], strides = [1, 1]} : vector<16x96xf32> to vector<16x32xf32>
      %143 = vector.extract_strided_slice %141 {offsets = [0, 0], sizes = [16, 32], strides = [1, 1]} : vector<16x96xf32> to vector<16x32xf32>
      %144 = arith.addf %142, %143 : vector<16x32xf32>
      %145 = arith.negf %144 : vector<16x32xf32>
      %146 = math.exp %145 : vector<16x32xf32>
      %cst_70 = arith.constant 1.000000e+00 : f32
      %147 = vector.broadcast %cst_70 : f32 to vector<16x32xf32>
      %148 = arith.addf %147, %146 : vector<16x32xf32>
      %149 = arith.divf %147, %148 : vector<16x32xf32>
      %150 = vector.extract_strided_slice %139 {offsets = [0, 32], sizes = [16, 32], strides = [1, 1]} : vector<16x96xf32> to vector<16x32xf32>
      %151 = vector.extract_strided_slice %141 {offsets = [0, 32], sizes = [16, 32], strides = [1, 1]} : vector<16x96xf32> to vector<16x32xf32>
      %152 = arith.addf %150, %151 : vector<16x32xf32>
      %153 = arith.negf %152 : vector<16x32xf32>
      %154 = math.exp %153 : vector<16x32xf32>
      %cst_71 = arith.constant 1.000000e+00 : f32
      %155 = vector.broadcast %cst_71 : f32 to vector<16x32xf32>
      %156 = arith.addf %155, %154 : vector<16x32xf32>
      %157 = arith.divf %155, %156 : vector<16x32xf32>
      %158 = vector.extract_strided_slice %139 {offsets = [0, 64], sizes = [16, 32], strides = [1, 1]} : vector<16x96xf32> to vector<16x32xf32>
      %159 = vector.extract_strided_slice %141 {offsets = [0, 64], sizes = [16, 32], strides = [1, 1]} : vector<16x96xf32> to vector<16x32xf32>
      %160 = arith.addf %159, %38 : vector<16x32xf32>
      %161 = arith.mulf %149, %160 : vector<16x32xf32>
      %162 = arith.addf %158, %161 : vector<16x32xf32>
      %163 = math.tanh %162 : vector<16x32xf32>
      %cst_72 = arith.constant 1.000000e+00 : f32
      %164 = vector.broadcast %cst_72 : f32 to vector<16x32xf32>
      %165 = arith.subf %164, %157 : vector<16x32xf32>
      %166 = arith.mulf %165, %163 : vector<16x32xf32>
      %167 = arith.mulf %157, %arg25 : vector<16x32xf32>
      %168 = arith.addf %166, %167 : vector<16x32xf32>
      %169 = vector.broadcast %arg23 : i32 to vector<16x1xi32>
      %170 = arith.cmpi slt, %169, %39 : vector<16x1xi32>
      %171 = vector.shape_cast %170 : vector<16x1xi1> to vector<16x1xi1>
      %172 = vector.broadcast %171 : vector<16x1xi1> to vector<16x32xi1>
      %173 = arith.select %172, %137, %arg24 : vector<16x32xi1>, vector<16x32xf32>
      %174 = vector.broadcast %100 : i32 to vector<16x1xi32>
      %175 = arith.cmpi slt, %174, %39 : vector<16x1xi32>
      %176 = vector.shape_cast %175 : vector<16x1xi1> to vector<16x1xi1>
      %177 = vector.broadcast %176 : vector<16x1xi1> to vector<16x32xi1>
      %178 = arith.select %177, %168, %arg25 : vector<16x32xi1>, vector<16x32xf32>
      scf.yield %173, %178 : vector<16x32xf32>, vector<16x32xf32>
    }
    %56 = tpu.concatenate %55#0, %55#1 in 1 : vector<16x32xf32>, vector<16x32xf32> -> vector<16x64xf32>
    %57 = arith.truncf %56 : vector<16x64xf32> to vector<16x64xbf16>
    %c0_35 = arith.constant 0 : index
    %c0_36 = arith.constant 0 : index
    %58 = vector.load %arg15[%c0_35, %c0_36] : memref<64x32xbf16, #tpu.memory_space<vmem>>, vector<64x32xbf16>
    %cst_37 = arith.constant dense<0.000000e+00> : vector<16x32xf32>
    %59 = tpu.matmul %57, %58, %cst_37 {dimension_numbers = #tpu.dot_dimension_numbers<[1], [0], [0], [1], [0, 0, 1, 1], [], []>} : vector<16x64xbf16>, vector<64x32xbf16>, vector<16x32xf32> -> vector<16x32xf32>
    %c0_38 = arith.constant 0 : index
    %c0_39 = arith.constant 0 : index
    %60 = vector.load %arg16[%c0_38, %c0_39] : memref<1x32xf32, #tpu.memory_space<vmem>>, vector<1x32xf32>
    %61 = vector.broadcast %60 : vector<1x32xf32> to vector<16x32xf32>
    %62 = arith.addf %59, %61 : vector<16x32xf32>
    %cst_40 = arith.constant dense<0.000000e+00> : vector<16xf32>
    %63 = vector.multi_reduction <add>, %62, %cst_40 [1] : vector<16x32xf32> to vector<16xf32>
    %64 = vector.shape_cast %63 : vector<16xf32> to vector<16x1xf32>
    %cst_41 = arith.constant 3.200000e+01 : f32
    %65 = vector.broadcast %cst_41 : f32 to vector<16x1xf32>
    %66 = arith.divf %64, %65 : vector<16x1xf32>
    %67 = vector.broadcast %66 : vector<16x1xf32> to vector<16x32xf32>
    %68 = arith.subf %62, %67 : vector<16x32xf32>
    %69 = arith.mulf %68, %68 : vector<16x32xf32>
    %cst_42 = arith.constant dense<0.000000e+00> : vector<16xf32>
    %70 = vector.multi_reduction <add>, %69, %cst_42 [1] : vector<16x32xf32> to vector<16xf32>
    %71 = vector.shape_cast %70 : vector<16xf32> to vector<16x1xf32>
    %cst_43 = arith.constant 3.200000e+01 : f32
    %72 = vector.broadcast %cst_43 : f32 to vector<16x1xf32>
    %73 = arith.divf %71, %72 : vector<16x1xf32>
    %74 = vector.broadcast %66 : vector<16x1xf32> to vector<16x32xf32>
    %75 = arith.subf %62, %74 : vector<16x32xf32>
    %cst_44 = arith.constant 9.99999974E-6 : f32
    %76 = vector.broadcast %cst_44 : f32 to vector<16x1xf32>
    %77 = arith.addf %73, %76 : vector<16x1xf32>
    %78 = math.rsqrt %77 : vector<16x1xf32>
    %79 = vector.broadcast %78 : vector<16x1xf32> to vector<16x32xf32>
    %80 = arith.mulf %75, %79 : vector<16x32xf32>
    %c0_45 = arith.constant 0 : index
    %c0_46 = arith.constant 0 : index
    %81 = vector.load %arg17[%c0_45, %c0_46] : memref<1x32xf32, #tpu.memory_space<vmem>>, vector<1x32xf32>
    %82 = vector.broadcast %81 : vector<1x32xf32> to vector<16x32xf32>
    %83 = arith.mulf %80, %82 : vector<16x32xf32>
    %c0_47 = arith.constant 0 : index
    %c0_48 = arith.constant 0 : index
    %84 = vector.load %arg18[%c0_47, %c0_48] : memref<1x32xf32, #tpu.memory_space<vmem>>, vector<1x32xf32>
    %85 = vector.broadcast %84 : vector<1x32xf32> to vector<16x32xf32>
    %86 = arith.addf %83, %85 : vector<16x32xf32>
    %cst_49 = arith.constant 0.000000e+00 : f32
    %87 = vector.broadcast %cst_49 : f32 to vector<16x32xf32>
    %88 = arith.cmpf ogt, %86, %87 : vector<16x32xf32>
    %cst_50 = arith.constant 2.000000e-01 : f32
    %89 = vector.broadcast %cst_50 : f32 to vector<16x32xf32>
    %90 = arith.mulf %89, %86 : vector<16x32xf32>
    %91 = arith.select %88, %86, %90 : vector<16x32xi1>, vector<16x32xf32>
    %92 = arith.truncf %91 : vector<16x32xf32> to vector<16x32xbf16>
    %c0_51 = arith.constant 0 : index
    %c0_52 = arith.constant 0 : index
    %93 = vector.load %arg19[%c0_51, %c0_52] : memref<32x32xbf16, #tpu.memory_space<vmem>>, vector<32x32xbf16>
    %cst_53 = arith.constant dense<0.000000e+00> : vector<16x32xf32>
    %94 = tpu.matmul %92, %93, %cst_53 {dimension_numbers = #tpu.dot_dimension_numbers<[1], [0], [0], [1], [0, 0, 1, 1], [], []>} : vector<16x32xbf16>, vector<32x32xbf16>, vector<16x32xf32> -> vector<16x32xf32>
    %c0_54 = arith.constant 0 : index
    %c0_55 = arith.constant 0 : index
    %95 = vector.load %arg20[%c0_54, %c0_55] : memref<1x32xf32, #tpu.memory_space<vmem>>, vector<1x32xf32>
    %96 = vector.broadcast %95 : vector<1x32xf32> to vector<16x32xf32>
    %97 = arith.addf %94, %96 : vector<16x32xf32>
    %c0_56 = arith.constant 0 : index
    %c0_57 = arith.constant 0 : index
    %98 = vector.load %arg21[%c0_56, %c0_57] : memref<16x32xf32, #tpu.memory_space<vmem>>, vector<16x32xf32>
    tpu.vector_store %arg21[%c0_56, %c0_57], %97 {strides = array<i32>} : memref<16x32xf32, #tpu.memory_space<vmem>>, vector<16x32xf32>,
    return
  }
  func.func @transform_0(%arg0: i32, %arg1: memref<1xi32, #tpu.memory_space<smem>>) -> (i32, i32, i32) {
    %c0_i32 = arith.constant 0 : i32
    %c0_i32_0 = arith.constant 0 : i32
    %c0_i32_1 = arith.constant 0 : i32
    return %c0_i32, %arg0, %c0_i32_0 : i32, i32, i32
  }
  func.func @transform_1(%arg0: i32, %arg1: memref<1xi32, #tpu.memory_space<smem>>) -> (i32, i32) {
    %c0_i32 = arith.constant 0 : i32
    %c0_i32_0 = arith.constant 0 : i32
    return %arg0, %c0_i32 : i32, i32
  }
  func.func @transform_2(%arg0: i32, %arg1: memref<1xi32, #tpu.memory_space<smem>>) -> (i32, i32) {
    %c0_i32 = arith.constant 0 : i32
    %c0_i32_0 = arith.constant 0 : i32
    %c0_i32_1 = arith.constant 0 : i32
    return %c0_i32, %c0_i32_0 : i32, i32
  }
  func.func @transform_3(%arg0: i32, %arg1: memref<1xi32, #tpu.memory_space<smem>>) -> (i32, i32) {
    %c0_i32 = arith.constant 0 : i32
    %c0_i32_0 = arith.constant 0 : i32
    %c0_i32_1 = arith.constant 0 : i32
    return %c0_i32, %c0_i32_0 : i32, i32
  }
  func.func @transform_4(%arg0: i32, %arg1: memref<1xi32, #tpu.memory_space<smem>>) -> (i32, i32) {
    %c0_i32 = arith.constant 0 : i32
    %c0_i32_0 = arith.constant 0 : i32
    %c0_i32_1 = arith.constant 0 : i32
    return %c0_i32, %c0_i32_0 : i32, i32
  }
  func.func @transform_5(%arg0: i32, %arg1: memref<1xi32, #tpu.memory_space<smem>>) -> (i32, i32) {
    %c0_i32 = arith.constant 0 : i32
    %c0_i32_0 = arith.constant 0 : i32
    %c0_i32_1 = arith.constant 0 : i32
    return %c0_i32, %c0_i32_0 : i32, i32
  }
  func.func @transform_6(%arg0: i32, %arg1: memref<1xi32, #tpu.memory_space<smem>>) -> (i32, i32) {
    %c0_i32 = arith.constant 0 : i32
    %c0_i32_0 = arith.constant 0 : i32
    %c0_i32_1 = arith.constant 0 : i32
    return %c0_i32, %c0_i32_0 : i32, i32
  }
  func.func @transform_7(%arg0: i32, %arg1: memref<1xi32, #tpu.memory_space<smem>>) -> (i32, i32) {
    %c0_i32 = arith.constant 0 : i32
    %c0_i32_0 = arith.constant 0 : i32
    %c0_i32_1 = arith.constant 0 : i32
    return %c0_i32, %c0_i32_0 : i32, i32
  }
  func.func @transform_8(%arg0: i32, %arg1: memref<1xi32, #tpu.memory_space<smem>>) -> (i32, i32) {
    %c0_i32 = arith.constant 0 : i32
    %c0_i32_0 = arith.constant 0 : i32
    %c0_i32_1 = arith.constant 0 : i32
    return %c0_i32, %c0_i32_0 : i32, i32
  }
  func.func @transform_9(%arg0: i32, %arg1: memref<1xi32, #tpu.memory_space<smem>>) -> (i32, i32) {
    %c0_i32 = arith.constant 0 : i32
    %c0_i32_0 = arith.constant 0 : i32
    %c0_i32_1 = arith.constant 0 : i32
    return %c0_i32, %c0_i32_0 : i32, i32
  }
  func.func @transform_10(%arg0: i32, %arg1: memref<1xi32, #tpu.memory_space<smem>>) -> (i32, i32) {
    %c0_i32 = arith.constant 0 : i32
    %c0_i32_0 = arith.constant 0 : i32
    %c0_i32_1 = arith.constant 0 : i32
    return %c0_i32, %c0_i32_0 : i32, i32
  }
  func.func @transform_11(%arg0: i32, %arg1: memref<1xi32, #tpu.memory_space<smem>>) -> (i32, i32) {
    %c0_i32 = arith.constant 0 : i32
    %c0_i32_0 = arith.constant 0 : i32
    %c0_i32_1 = arith.constant 0 : i32
    return %c0_i32, %c0_i32_0 : i32, i32
  }
  func.func @transform_12(%arg0: i32, %arg1: memref<1xi32, #tpu.memory_space<smem>>) -> (i32, i32) {
    %c0_i32 = arith.constant 0 : i32
    %c0_i32_0 = arith.constant 0 : i32
    %c0_i32_1 = arith.constant 0 : i32
    return %c0_i32, %c0_i32_0 : i32, i32
  }
  func.func @transform_13(%arg0: i32, %arg1: memref<1xi32, #tpu.memory_space<smem>>) -> (i32, i32) {
    %c0_i32 = arith.constant 0 : i32
    %c0_i32_0 = arith.constant 0 : i32
    %c0_i32_1 = arith.constant 0 : i32
    return %c0_i32, %c0_i32_0 : i32, i32
  }
  func.func @transform_14(%arg0: i32, %arg1: memref<1xi32, #tpu.memory_space<smem>>) -> (i32, i32) {
    %c0_i32 = arith.constant 0 : i32
    %c0_i32_0 = arith.constant 0 : i32
    %c0_i32_1 = arith.constant 0 : i32
    return %c0_i32, %c0_i32_0 : i32, i32
  }
  func.func @transform_15(%arg0: i32, %arg1: memref<1xi32, #tpu.memory_space<smem>>) -> (i32, i32) {
    %c0_i32 = arith.constant 0 : i32
    %c0_i32_0 = arith.constant 0 : i32
    %c0_i32_1 = arith.constant 0 : i32
    return %c0_i32, %c0_i32_0 : i32, i32
  }
  func.func @transform_16(%arg0: i32, %arg1: memref<1xi32, #tpu.memory_space<smem>>) -> (i32, i32) {
    %c0_i32 = arith.constant 0 : i32
    %c0_i32_0 = arith.constant 0 : i32
    %c0_i32_1 = arith.constant 0 : i32
    return %c0_i32, %c0_i32_0 : i32, i32
  }
  func.func @transform_17(%arg0: i32, %arg1: memref<1xi32, #tpu.memory_space<smem>>) -> (i32, i32) {
    %c0_i32 = arith.constant 0 : i32
    %c0_i32_0 = arith.constant 0 : i32
    %c0_i32_1 = arith.constant 0 : i32
    return %c0_i32, %c0_i32_0 : i32, i32
  }
  func.func @transform_18(%arg0: i32, %arg1: memref<1xi32, #tpu.memory_space<smem>>) -> (i32, i32) {
    %c0_i32 = arith.constant 0 : i32
    %c0_i32_0 = arith.constant 0 : i32
    %c0_i32_1 = arith.constant 0 : i32
    return %c0_i32, %c0_i32_0 : i32, i32
  }
  func.func @transform_19(%arg0: i32, %arg1: memref<1xi32, #tpu.memory_space<smem>>) -> (i32, i32) {
    %c0_i32 = arith.constant 0 : i32
    %c0_i32_0 = arith.constant 0 : i32
    return %arg0, %c0_i32 : i32, i32
  }
}

</mosaic_0001>

<llo_original>
// kernel: tpu_custom_call.1
$region0: #{tpu_custom_call.1}
  #allocation0 [shape = 'u32[]', space=smem, size = 0x4, offset = 0x4, fixed_abs, tag = 'smem constant byte address 0x4 - core index']
  #allocation1 [shape = 'u32[144,128]{1,0:T(1,128)}', space=vmem, size = 0x12000, scoped, tag = 'internal scratch']
  #allocation2 [shape = 'bf16[8,16,32]{2,1,0:T(16,128)(2,1)}', space=vmem, size = 0x8000, scoped, tag = 'scratch operand']
  #allocation3 [shape = 's32[1]{0}', space=sflag, size = 0x4, scoped, tag = 'scoped memory for tpu_custom_call.1']
  #allocation4 [shape = 's32[1]{0:T(128)S(6)}', space=smem, size = 0x200, scoped, tag = 'prefetched SMEM operand 0']
  %s0 = inlined_call_operand.<no memory space> [shape: s32[1], index: 0, kind: input, shape index: {}]
  %s1 = inlined_call_operand.vmem [shape: bf16[8,16,32], index: 1, kind: input, shape index: {}]
  %s2 = inlined_call_operand.vmem [shape: s32[16,1], index: 2, kind: input, shape index: {}]
  %s3 = inlined_call_operand.hbm [shape: bf16[32,32], index: 3, kind: input, shape index: {}]
  %s4 = inlined_call_operand.hbm [shape: f32[1,32], index: 4, kind: input, shape index: {}]
  %s5 = inlined_call_operand.hbm [shape: bf16[32,96], index: 5, kind: input, shape index: {}]
  %s6 = inlined_call_operand.hbm [shape: bf16[32,96], index: 6, kind: input, shape index: {}]
  %s7 = inlined_call_operand.hbm [shape: f32[1,96], index: 7, kind: input, shape index: {}]
  %s8 = inlined_call_operand.hbm [shape: f32[1,96], index: 8, kind: input, shape index: {}]
  %s9 = inlined_call_operand.vmem [shape: bf16[32,96], index: 9, kind: input, shape index: {}]
  %s10 = inlined_call_operand.hbm [shape: bf16[32,96], index: 10, kind: input, shape index: {}]
  %s11 = inlined_call_operand.hbm [shape: f32[1,96], index: 11, kind: input, shape index: {}]
  %s12 = inlined_call_operand.hbm [shape: f32[1,96], index: 12, kind: input, shape index: {}]
  %s13 = inlined_call_operand.vmem [shape: f32[2,32], index: 13, kind: input, shape index: {}]
  %s14 = inlined_call_operand.vmem [shape: bf16[64,32], index: 14, kind: input, shape index: {}]
  %s15 = inlined_call_operand.vmem [shape: f32[1,32], index: 15, kind: input, shape index: {}]
  %s16 = inlined_call_operand.vmem [shape: f32[1,32], index: 16, kind: input, shape index: {}]
  %s17 = inlined_call_operand.vmem [shape: f32[1,32], index: 17, kind: input, shape index: {}]
  %s18 = inlined_call_operand.vmem [shape: bf16[32,32], index: 18, kind: input, shape index: {}]
  %s19 = inlined_call_operand.vmem [shape: f32[1,32], index: 19, kind: input, shape index: {}]
  %s20 = inlined_call_operand.hbm [shape: f32[16,32], index: 20, kind: output, shape index: {}]
  %s21 = sld [smem:[#allocation0]]
  $region129: #{tpu_custom_call.1} parent=0
    _
  %s23 = ssub.s32 1, %s21
  %s24 = scalar_select 0, %s23, %s21
  %25 = sst [smem:[#allocation4]] %s0
  $region1: #{tpu_custom_call.1} parent=0
    #allocation5 [shape = 'u8[8192]{0}', space=vmem, size = 0x2000, scoped, tag = 'input window, operand 3, single buffered']
    #allocation6 [shape = 's32[1]{0}', space=sflag, size = 0x4, scoped, tag = 'scoped memory for tpu_custom_call.1']
    #allocation7 [shape = 's32[1]{0}', space=sflag, size = 0x4, scoped, tag = 'scoped memory for tpu_custom_call.1']
    #allocation8 [shape = 'u8[512]{0}', space=vmem, size = 0x400, scoped, tag = 'input window, operand 4, single buffered']
    #allocation9 [shape = 's32[1]{0}', space=sflag, size = 0x4, scoped, tag = 'scoped memory for tpu_custom_call.1']
    #allocation10 [shape = 'u8[8192]{0}', space=vmem, size = 0x2000, scoped, tag = 'input window, operand 5, single buffered']
    #allocation11 [shape = 'u8[8192]{0}', space=vmem, size = 0x2000, scoped, tag = 'input window, operand 6, single buffered']
    #allocation12 [shape = 's32[1]{0}', space=sflag, size = 0x4, scoped, tag = 'scoped memory for tpu_custom_call.1']
    #allocation13 [shape = 'u8[512]{0}', space=vmem, size = 0x400, scoped, tag = 'input window, operand 7, single buffered']
    #allocation14 [shape = 'u8[512]{0}', space=vmem, size = 0x400, scoped, tag = 'input window, operand 8, single buffered']
    #allocation15 [shape = 's32[1]{0}', space=sflag, size = 0x4, scoped, tag = 'scoped memory for tpu_custom_call.1']
    #allocation16 [shape = 'u8[8192]{0}', space=vmem, size = 0x2000, scoped, tag = 'input window, operand 10, single buffered']
    #allocation17 [shape = 'u8[512]{0}', space=vmem, size = 0x400, scoped, tag = 'input window, operand 11, single buffered']
    #allocation18 [shape = 's32[1]{0}', space=sflag, size = 0x4, scoped, tag = 'scoped memory for tpu_custom_call.1']
    #allocation19 [shape = 'u8[512]{0}', space=vmem, size = 0x400, scoped, tag = 'input window, operand 12, single buffered']
    #allocation20 [shape = 'u8[8192]{0}', space=vmem, size = 0x2000, scoped, tag = 'output window, operand 0, single buffered']
    %26 = vsyncpa [#allocation6], 0
    %27 = vsyncpa [#allocation9], 0
    %28 = vsyncpa [#allocation12], 0
    %29 = vsyncpa [#allocation15], 0
    %30 = vsyncpa [#allocation18], 0
    %31 = vsyncpa [#allocation7], 0
    // Predicated region
    $region2: #{tpu_custom_call.1} parent=1 // pred_check
      _
    $region3: #{tpu_custom_call.1} parent=1 // pred_check_branch
      %33 = sbr.rel (0) target = $region5
    $region4: #{tpu_custom_call.1} parent=1 // pred_region
      _
    $region5: #{tpu_custom_call.1} parent=1 // pred_fallthru
      _
    // Predicated region
    $region6: #{tpu_custom_call.1} parent=1 // pred_check
      _
    $region7: #{tpu_custom_call.1} parent=1 // pred_check_branch
      %35 = sbr.rel (0) target = $region9
    $region8: #{tpu_custom_call.1} parent=1 // pred_region
      _
    $region9: #{tpu_custom_call.1} parent=1 // pred_fallthru
      _
    // Predicated region
    $region10: #{tpu_custom_call.1} parent=1 // pred_check
      _
    $region11: #{tpu_custom_call.1} parent=1 // pred_check_branch
      %37 = sbr.rel (0) target = $region13
    $region12: #{tpu_custom_call.1} parent=1 // pred_region
      %s39 = ssub.s32 256, 256
      %40 = vsyncadd [#allocation6], %s39
      %s41 = sshll.u32 [#allocation5], 4
      %s42 = int_to_ptr.vmem [resolvable:$true] %s41
      %47 = dma.hbm_to_vmem [thread:$0]  %s3, 256, %s42, [#allocation6], 64, 64, 4
    $region13: #{tpu_custom_call.1} parent=1 // pred_fallthru
      _
    // Predicated region
    $region14: #{tpu_custom_call.1} parent=1 // pred_check
      _
    $region15: #{tpu_custom_call.1} parent=1 // pred_check_branch
      %49 = sbr.rel (0) target = $region17
    $region16: #{tpu_custom_call.1} parent=1 // pred_region
      %s51 = ssub.s32 16, 16
      %52 = vsyncadd [#allocation9], %s51
      %s54 = sshll.u32 [#allocation8], 4
      %s55 = int_to_ptr.vmem [resolvable:$true] %s54
      %57 = dma.hbm_to_vmem [thread:$0]  %s4, 16, %s55, [#allocation9]
    $region17: #{tpu_custom_call.1} parent=1 // pred_fallthru
      _
    // Predicated region
    $region18: #{tpu_custom_call.1} parent=1 // pred_check
      _
    $region19: #{tpu_custom_call.1} parent=1 // pred_check_branch
      %59 = sbr.rel (0) target = $region21
    $region20: #{tpu_custom_call.1} parent=1 // pred_region
      %s61 = ssub.s32 256, 256
      %62 = vsyncadd [#allocation9], %s61
      %s63 = sshll.u32 [#allocation10], 4
      %s64 = int_to_ptr.vmem [resolvable:$true] %s63
      %69 = dma.hbm_to_vmem [thread:$0]  %s5, 256, %s64, [#allocation9], 64, 64, 4
    $region21: #{tpu_custom_call.1} parent=1 // pred_fallthru
      _
    // Predicated region
    $region22: #{tpu_custom_call.1} parent=1 // pred_check
      _
    $region23: #{tpu_custom_call.1} parent=1 // pred_check_branch
      %71 = sbr.rel (0) target = $region25
    $region24: #{tpu_custom_call.1} parent=1 // pred_region
      %s73 = ssub.s32 256, 256
      %74 = vsyncadd [#allocation12], %s73
      %s75 = sshll.u32 [#allocation11], 4
      %s76 = int_to_ptr.vmem [resolvable:$true] %s75
      %81 = dma.hbm_to_vmem [thread:$0]  %s6, 256, %s76, [#allocation12], 64, 64, 4
    $region25: #{tpu_custom_call.1} parent=1 // pred_fallthru
      _
    // Predicated region
    $region26: #{tpu_custom_call.1} parent=1 // pred_check
      _
    $region27: #{tpu_custom_call.1} parent=1 // pred_check_branch
      %83 = sbr.rel (0) target = $region29
    $region28: #{tpu_custom_call.1} parent=1 // pred_region
      %s85 = ssub.s32 16, 16
      %86 = vsyncadd [#allocation12], %s85
      %s88 = sshll.u32 [#allocation13], 4
      %s89 = int_to_ptr.vmem [resolvable:$true] %s88
      %91 = dma.hbm_to_vmem [thread:$0]  %s7, 16, %s89, [#allocation12]
    $region29: #{tpu_custom_call.1} parent=1 // pred_fallthru
      _
    // Predicated region
    $region30: #{tpu_custom_call.1} parent=1 // pred_check
      _
    $region31: #{tpu_custom_call.1} parent=1 // pred_check_branch
      %93 = sbr.rel (0) target = $region33
    $region32: #{tpu_custom_call.1} parent=1 // pred_region
      %s95 = ssub.s32 16, 16
      %96 = vsyncadd [#allocation15], %s95
      %s98 = sshll.u32 [#allocation14], 4
      %s99 = int_to_ptr.vmem [resolvable:$true] %s98
      %101 = dma.hbm_to_vmem [thread:$0]  %s8, 16, %s99, [#allocation15]
    $region33: #{tpu_custom_call.1} parent=1 // pred_fallthru
      _
    // Predicated region
    $region34: #{tpu_custom_call.1} parent=1 // pred_check
      _
    $region35: #{tpu_custom_call.1} parent=1 // pred_check_branch
      %103 = sbr.rel (0) target = $region37
    $region36: #{tpu_custom_call.1} parent=1 // pred_region
      _
    $region37: #{tpu_custom_call.1} parent=1 // pred_fallthru
      _
    // Predicated region
    $region38: #{tpu_custom_call.1} parent=1 // pred_check
      _
    $region39: #{tpu_custom_call.1} parent=1 // pred_check_branch
      %105 = sbr.rel (0) target = $region41
    $region40: #{tpu_custom_call.1} parent=1 // pred_region
      %s107 = ssub.s32 256, 256
      %108 = vsyncadd [#allocation15], %s107
      %s109 = sshll.u32 [#allocation16], 4
      %s110 = int_to_ptr.vmem [resolvable:$true] %s109
      %115 = dma.hbm_to_vmem [thread:$0]  %s10, 256, %s110, [#allocation15], 64, 64, 4
    $region41: #{tpu_custom_call.1} parent=1 // pred_fallthru
      _
    // Predicated region
    $region42: #{tpu_custom_call.1} parent=1 // pred_check
      _
    $region43: #{tpu_custom_call.1} parent=1 // pred_check_branch
      %117 = sbr.rel (0) target = $region45
    $region44: #{tpu_custom_call.1} parent=1 // pred_region
      %s119 = ssub.s32 16, 16
      %120 = vsyncadd [#allocation18], %s119
      %s122 = sshll.u32 [#allocation17], 4
      %s123 = int_to_ptr.vmem [resolvable:$true] %s122
      %125 = dma.hbm_to_vmem [thread:$0]  %s11, 16, %s123, [#allocation18]
    $region45: #{tpu_custom_call.1} parent=1 // pred_fallthru
      _
    // Predicated region
    $region46: #{tpu_custom_call.1} parent=1 // pred_check
      _
    $region47: #{tpu_custom_call.1} parent=1 // pred_check_branch
      %127 = sbr.rel (0) target = $region49
    $region48: #{tpu_custom_call.1} parent=1 // pred_region
      %s129 = ssub.s32 16, 16
      %130 = vsyncadd [#allocation18], %s129
      %s132 = sshll.u32 [#allocation19], 4
      %s133 = int_to_ptr.vmem [resolvable:$true] %s132
      %135 = dma.hbm_to_vmem [thread:$0]  %s12, 16, %s133, [#allocation18]
    $region49: #{tpu_custom_call.1} parent=1 // pred_fallthru
      _
    // Predicated region
    $region50: #{tpu_custom_call.1} parent=1 // pred_check
      _
    $region51: #{tpu_custom_call.1} parent=1 // pred_check_branch
      %137 = sbr.rel (0) target = $region53
    $region52: #{tpu_custom_call.1} parent=1 // pred_region
      _
    $region53: #{tpu_custom_call.1} parent=1 // pred_fallthru
      _
    // Predicated region
    $region54: #{tpu_custom_call.1} parent=1 // pred_check
      _
    $region55: #{tpu_custom_call.1} parent=1 // pred_check_branch
      %139 = sbr.rel (0) target = $region57
    $region56: #{tpu_custom_call.1} parent=1 // pred_region
      _
    $region57: #{tpu_custom_call.1} parent=1 // pred_fallthru
      _
    // Predicated region
    $region58: #{tpu_custom_call.1} parent=1 // pred_check
      _
    $region59: #{tpu_custom_call.1} parent=1 // pred_check_branch
      %141 = sbr.rel (0) target = $region61
    $region60: #{tpu_custom_call.1} parent=1 // pred_region
      _
    $region61: #{tpu_custom_call.1} parent=1 // pred_fallthru
      _
    // Predicated region
    $region62: #{tpu_custom_call.1} parent=1 // pred_check
      _
    $region63: #{tpu_custom_call.1} parent=1 // pred_check_branch
      %143 = sbr.rel (0) target = $region65
    $region64: #{tpu_custom_call.1} parent=1 // pred_region
      _
    $region65: #{tpu_custom_call.1} parent=1 // pred_fallthru
      _
    // Predicated region
    $region66: #{tpu_custom_call.1} parent=1 // pred_check
      _
    $region67: #{tpu_custom_call.1} parent=1 // pred_check_branch
      %145 = sbr.rel (0) target = $region69
    $region68: #{tpu_custom_call.1} parent=1 // pred_region
      _
    $region69: #{tpu_custom_call.1} parent=1 // pred_fallthru
      _
    // Predicated region
    $region70: #{tpu_custom_call.1} parent=1 // pred_check
      _
    $region71: #{tpu_custom_call.1} parent=1 // pred_check_branch
      %147 = sbr.rel (0) target = $region73
    $region72: #{tpu_custom_call.1} parent=1 // pred_region
      _
    $region73: #{tpu_custom_call.1} parent=1 // pred_fallthru
      _
    // Predicated region
    $region74: #{tpu_custom_call.1} parent=1 // pred_check
      _
    $region75: #{tpu_custom_call.1} parent=1 // pred_check_branch
      %149 = sbr.rel (0) target = $region77
    $region76: #{tpu_custom_call.1} parent=1 // pred_region
      _
    $region77: #{tpu_custom_call.1} parent=1 // pred_fallthru
      _
    // Predicated region
    $region78: #{tpu_custom_call.1} parent=1 // pred_check
      _
    $region79: #{tpu_custom_call.1} parent=1 // pred_check_branch
      %151 = sbr.rel (0) target = $region81
    $region80: #{tpu_custom_call.1} parent=1 // pred_region
      %152 = dma.done [#allocation6], 256
    $region81: #{tpu_custom_call.1} parent=1 // pred_fallthru
      _
    // Predicated region
    $region82: #{tpu_custom_call.1} parent=1 // pred_check
      _
    $region83: #{tpu_custom_call.1} parent=1 // pred_check_branch
      %154 = sbr.rel (0) target = $region85
    $region84: #{tpu_custom_call.1} parent=1 // pred_region
      %155 = dma.done [#allocation9], 16
    $region85: #{tpu_custom_call.1} parent=1 // pred_fallthru
      _
    // Predicated region
    $region86: #{tpu_custom_call.1} parent=1 // pred_check
      _
    $region87: #{tpu_custom_call.1} parent=1 // pred_check_branch
      %157 = sbr.rel (0) target = $region89
    $region88: #{tpu_custom_call.1} parent=1 // pred_region
      %158 = dma.done [#allocation9], 256
    $region89: #{tpu_custom_call.1} parent=1 // pred_fallthru
      _
    // Predicated region
    $region90: #{tpu_custom_call.1} parent=1 // pred_check
      _
    $region91: #{tpu_custom_call.1} parent=1 // pred_check_branch
      %160 = sbr.rel (0) target = $region93
    $region92: #{tpu_custom_call.1} parent=1 // pred_region
      %161 = dma.done [#allocation12], 256
    $region93: #{tpu_custom_call.1} parent=1 // pred_fallthru
      _
    // Predicated region
    $region94: #{tpu_custom_call.1} parent=1 // pred_check
      _
    $region95: #{tpu_custom_call.1} parent=1 // pred_check_branch
      %163 = sbr.rel (0) target = $region97
    $region96: #{tpu_custom_call.1} parent=1 // pred_region
      %164 = dma.done [#allocation12], 16
    $region97: #{tpu_custom_call.1} parent=1 // pred_fallthru
      _
    // Predicated region
    $region98: #{tpu_custom_call.1} parent=1 // pred_check
      _
    $region99: #{tpu_custom_call.1} parent=1 // pred_check_branch
      %166 = sbr.rel (0) target = $region101
    $region100: #{tpu_custom_call.1} parent=1 // pred_region
      %167 = dma.done [#allocation15], 16
    $region101: #{tpu_custom_call.1} parent=1 // pred_fallthru
      _
    // Predicated region
    $region102: #{tpu_custom_call.1} parent=1 // pred_check
      _
    $region103: #{tpu_custom_call.1} parent=1 // pred_check_branch
      %169 = sbr.rel (0) target = $region105
    $region104: #{tpu_custom_call.1} parent=1 // pred_region
      %170 = dma.done [#allocation15], 256
    $region105: #{tpu_custom_call.1} parent=1 // pred_fallthru
      _
    // Predicated region
    $region106: #{tpu_custom_call.1} parent=1 // pred_check
      _
    $region107: #{tpu_custom_call.1} parent=1 // pred_check_branch
      %172 = sbr.rel (0) target = $region109
    $region108: #{tpu_custom_call.1} parent=1 // pred_region
      %173 = dma.done [#allocation18], 16
    $region109: #{tpu_custom_call.1} parent=1 // pred_fallthru
      _
    // Predicated region
    $region110: #{tpu_custom_call.1} parent=1 // pred_check
      _
    $region111: #{tpu_custom_call.1} parent=1 // pred_check_branch
      %175 = sbr.rel (0) target = $region113
    $region112: #{tpu_custom_call.1} parent=1 // pred_region
      %176 = dma.done [#allocation18], 16
    $region113: #{tpu_custom_call.1} parent=1 // pred_fallthru
      _
    %v178 = vld [vmem:[#allocation5] sm:$0xf]
    %v179 = vld [vmem:[#allocation5 + $0x4] sm:$0xf]
    %v180 = vld [vmem:[#allocation5 + $0x8] sm:$0xf]
    %v181 = vld [vmem:[#allocation5 + $0xc] sm:$0xf]
    %v182 = vld [vmem:[#allocation8] sm:$0x1]
    %s183 = smul.u32 0, 2
    %s184 = smul.addr %s183, 4
    %s185 = scalar_lea.vmem %s1, %s184
    %v186 = vld [vmem:[%s185] sm:$0xf]
    %v187 = vld [vmem:[%s185 + $0x4] sm:$0xf]
    %v188 = vld [vmem:[%s185 + $0x8] sm:$0xf]
    %v189 = vld [vmem:[%s185 + $0xc] sm:$0xf]
    %v190 = vld [vmem:[%s185 + $0x10] sm:$0xf]
    %v191 = vld [vmem:[%s185 + $0x14] sm:$0xf]
    %v192 = vld [vmem:[%s185 + $0x18] sm:$0xf]
    %v193 = vld [vmem:[%s185 + $0x1c] sm:$0xf]
    %v194 = vld [vmem:[%s185 + $0x20] sm:$0xf]
    %v195 = vld [vmem:[%s185 + $0x24] sm:$0xf]
    %v196 = vld [vmem:[%s185 + $0x28] sm:$0xf]
    %v197 = vld [vmem:[%s185 + $0x2c] sm:$0xf]
    %v198 = vld [vmem:[%s185 + $0x30] sm:$0xf]
    %v199 = vld [vmem:[%s185 + $0x34] sm:$0xf]
    %v200 = vld [vmem:[%s185 + $0x38] sm:$0xf]
    %v201 = vld [vmem:[%s185 + $0x3c] sm:$0xf]
    %v203 = vlaneseq
    %v204 = vshrl.u32 %v203, 7
    %v205 = vsub.s32 0, %v204
    %v206 = vrot.slane %v182, %v205
    %v224 = vunpack.c.l.b16 %v186
    %v225 = vunpack.c.l.b16 %v187
    %v226 = vunpack.c.l.b16 %v188
    %v227 = vunpack.c.l.b16 %v189
    %v228 = vunpack.c.l.b16 %v190
    %v229 = vunpack.c.l.b16 %v191
    %v230 = vunpack.c.l.b16 %v192
    %v231 = vunpack.c.l.b16 %v193
    %v232 = vunpack.c.l.b16 %v194
    %v233 = vunpack.c.l.b16 %v195
    %v234 = vunpack.c.l.b16 %v196
    %v235 = vunpack.c.l.b16 %v197
    %v236 = vunpack.c.l.b16 %v198
    %v237 = vunpack.c.l.b16 %v199
    %v238 = vunpack.c.l.b16 %v200
    %v239 = vunpack.c.l.b16 %v201
    %v240 = vpack.c.b16 %v225, %v224
    %v241 = vpack.c.b16 %v227, %v226
    %v242 = vpack.c.b16 %v229, %v228
    %v243 = vpack.c.b16 %v231, %v230
    %v244 = vpack.c.b16 %v233, %v232
    %v245 = vpack.c.b16 %v235, %v234
    %v246 = vpack.c.b16 %v237, %v236
    %v247 = vpack.c.b16 %v239, %v238
    %v252 = vunpack.c.l.b16 %v178
    %v253 = vunpack.c.l.b16 %v179
    %v254 = vunpack.c.l.b16 %v180
    %v255 = vunpack.c.l.b16 %v181
    %v256 = vpack.c.b16 %v253, %v252
    %v257 = vpack.c.b16 %v255, %v254
    %vm260 = vcmask 261120
    %v262 = vsel %vm260, %v240, 0
    %v265 = vsel %vm260, %v241, 0
    %v268 = vsel %vm260, %v242, 0
    %v271 = vsel %vm260, %v243, 0
    %v274 = vsel %vm260, %v244, 0
    %v277 = vsel %vm260, %v245, 0
    %v280 = vsel %vm260, %v246, 0
    %v283 = vsel %vm260, %v247, 0
    %285 = vmatprep.subr.bf16.mxu0 0
    %286 = vmatpush1.bf16.msra.mxu0 %v256
    %287 = vmatprep.subr.bf16.mxu0 0
    %288 = vmatpush1.bf16.msra.mxu0 %v257
    %289 = vmatprep.subr.bf16.mxu0 0
    %290 = vmatpush1.bf16.msra.mxu0 0
    %291 = vmatprep.subr.bf16.mxu0 0
    %292 = vmatpush1.bf16.msra.mxu0 0
    %293 = vmatprep.subr.bf16.mxu0 0
    %294 = vmatpush1.bf16.msra.mxu0 0
    %295 = vmatprep.subr.bf16.mxu0 0
    %296 = vmatpush1.bf16.msra.mxu0 0
    %297 = vmatprep.subr.bf16.mxu0 0
    %298 = vmatpush1.bf16.msra.mxu0 0
    %299 = vmatprep.subr.bf16.mxu0 0
    %300 = vmatpush1.bf16.msra.mxu0 0
    %301 = vmatprep.subr.bf16.mxu0 0
    %302 = vmatpush1.bf16.msra.mxu0 0
    %303 = vmatprep.subr.bf16.mxu0 0
    %304 = vmatpush1.bf16.msra.mxu0 0
    %305 = vmatprep.subr.bf16.mxu0 0
    %306 = vmatpush1.bf16.msra.mxu0 0
    %307 = vmatprep.subr.bf16.mxu0 0
    %308 = vmatpush1.bf16.msra.mxu0 0
    %309 = vmatprep.subr.bf16.mxu0 0
    %310 = vmatpush1.bf16.msra.mxu0 0
    %311 = vmatprep.subr.bf16.mxu0 0
    %312 = vmatpush1.bf16.msra.mxu0 0
    %313 = vmatprep.subr.bf16.mxu0 0
    %314 = vmatpush1.bf16.msra.mxu0 0
    %315 = vmatprep.subr.bf16.mxu0 0
    %316 = vmatpush1.bf16.msra.mxu0 0
    %317 = vmatprep.mubr.bf16.mxu0 0
    %318 = vmatmul.mubr.bf16.gmra.mrb[0].mxu0 %v262
    %v319 = vpop.f32.mrb[0].mxu0
    %v320 = vadd.f32 %v206, %v319
    %v321 = vpop.f32.mrb[0].mxu0
    %v322 = vpop.f32.mrb[0].mxu0
    %v323 = vadd.f32 %v206, %v322
    %v324 = vpop.f32.mrb[0].mxu0
    %325 = vmatprep.mubr.bf16.mxu0 0
    %326 = vmatmul.mubr.bf16.gmra.mrb[0].mxu0 %v265
    %v327 = vpop.f32.mrb[0].mxu0
    %v328 = vadd.f32 %v206, %v327
    %v329 = vpop.f32.mrb[0].mxu0
    %v330 = vpop.f32.mrb[0].mxu0
    %v331 = vadd.f32 %v206, %v330
    %v332 = vpop.f32.mrb[0].mxu0
    %333 = vmatprep.mubr.bf16.mxu0 0
    %334 = vmatmul.mubr.bf16.gmra.mrb[0].mxu0 %v268
    %v335 = vpop.f32.mrb[0].mxu0
    %v336 = vadd.f32 %v206, %v335
    %v337 = vpop.f32.mrb[0].mxu0
    %v338 = vpop.f32.mrb[0].mxu0
    %v339 = vadd.f32 %v206, %v338
    %v340 = vpop.f32.mrb[0].mxu0
    %341 = vmatprep.mubr.bf16.mxu0 0
    %342 = vmatmul.mubr.bf16.gmra.mrb[0].mxu0 %v271
    %v343 = vpop.f32.mrb[0].mxu0
    %v344 = vadd.f32 %v206, %v343
    %v345 = vpop.f32.mrb[0].mxu0
    %v346 = vpop.f32.mrb[0].mxu0
    %v347 = vadd.f32 %v206, %v346
    %v348 = vpop.f32.mrb[0].mxu0
    %349 = vmatprep.mubr.bf16.mxu0 0
    %350 = vmatmul.mubr.bf16.gmra.mrb[0].mxu0 %v274
    %v351 = vpop.f32.mrb[0].mxu0
    %v352 = vadd.f32 %v206, %v351
    %v353 = vpop.f32.mrb[0].mxu0
    %v354 = vpop.f32.mrb[0].mxu0
    %v355 = vadd.f32 %v206, %v354
    %v356 = vpop.f32.mrb[0].mxu0
    %357 = vmatprep.mubr.bf16.mxu0 0
    %358 = vmatmul.mubr.bf16.gmra.mrb[0].mxu0 %v277
    %v359 = vpop.f32.mrb[0].mxu0
    %v360 = vadd.f32 %v206, %v359
    %v361 = vpop.f32.mrb[0].mxu0
    %v362 = vpop.f32.mrb[0].mxu0
    %v363 = vadd.f32 %v206, %v362
    %v364 = vpop.f32.mrb[0].mxu0
    %365 = vmatprep.mubr.bf16.mxu0 0
    %366 = vmatmul.mubr.bf16.gmra.mrb[0].mxu0 %v280
    %v367 = vpop.f32.mrb[0].mxu0
    %v368 = vadd.f32 %v206, %v367
    %v369 = vpop.f32.mrb[0].mxu0
    %v370 = vpop.f32.mrb[0].mxu0
    %v371 = vadd.f32 %v206, %v370
    %v372 = vpop.f32.mrb[0].mxu0
    %373 = vmatprep.mubr.bf16.mxu0 0
    %374 = vmatmul.mubr.bf16.gmra.mrb[0].mxu0 %v283
    %v375 = vpop.f32.mrb[0].mxu0
    %v376 = vadd.f32 %v206, %v375
    %v377 = vpop.f32.mrb[0].mxu0
    %v378 = vpop.f32.mrb[0].mxu0
    %v379 = vadd.f32 %v206, %v378
    %v380 = vpop.f32.mrb[0].mxu0
    %381 = vdwg.mxu0
    %v382 = vpack.c.bf16 %v323, %v320
    %v383 = vpack.c.bf16 %v331, %v328
    %v384 = vpack.c.bf16 %v339, %v336
    %v385 = vpack.c.bf16 %v347, %v344
    %v386 = vpack.c.bf16 %v355, %v352
    %v387 = vpack.c.bf16 %v363, %v360
    %v388 = vpack.c.bf16 %v371, %v368
    %v389 = vpack.c.bf16 %v379, %v376
    %390 = vst.msk [vmem:[#allocation2] sm:$0xff] %vm260, %v382
    %391 = vst.msk [vmem:[#allocation2 + $0x8] sm:$0xff] %vm260, %v383
    %392 = vst.msk [vmem:[#allocation2 + $0x10] sm:$0xff] %vm260, %v384
    %393 = vst.msk [vmem:[#allocation2 + $0x18] sm:$0xff] %vm260, %v385
    %394 = vst.msk [vmem:[#allocation2 + $0x20] sm:$0xff] %vm260, %v386
    %395 = vst.msk [vmem:[#allocation2 + $0x28] sm:$0xff] %vm260, %v387
    %396 = vst.msk [vmem:[#allocation2 + $0x30] sm:$0xff] %vm260, %v388
    %397 = vst.msk [vmem:[#allocation2 + $0x38] sm:$0xff] %vm260, %v389
    %v398 = vlaneseq
    %v399 = vand.u32 %v398, 127
    %vm400 = vcmp.lt.s32.totalorder %v399, 64
    %v401 = vld [vmem:[#allocation13] sm:$0x1]
    %v402 = vld [vmem:[#allocation14] sm:$0x1]
    %v403 = vsel %vm400, %v402, 0.0
    %v404 = vadd.f32 %v401, %v403
    %v406 = vlaneseq
    %v407 = vshrl.u32 %v406, 7
    %v408 = vsub.s32 0, %v407
    %v409 = vrot.slane %v404, %v408
    %v411 = vld [vmem:[#allocation17] sm:$0x1]
    %v412 = vld [vmem:[#allocation19] sm:$0x1]
    %v413 = vsel %vm400, %v412, 0.0
    %v414 = vadd.f32 %v411, %v413
    %v416 = vlaneseq
    %v417 = vshrl.u32 %v416, 7
    %v418 = vsub.s32 0, %v417
    %v419 = vrot.slane %v414, %v418
    %v422 = vlaneseq
    %v423 = vshrl.u32 %v422, 7
    %v424 = vsub.s32 0, %v423
    %v425 = vrot.slane %v402, %v424
    %v428 = vlaneseq
    %v429 = vshrl.u32 %v428, 7
    %v430 = vsub.s32 0, %v429
    %v431 = vrot.slane %v412, %v430
    %v433 = vld [vmem:[%s2] sm:$0xff]
    %v434 = vld [vmem:[%s2 + $0x8] sm:$0xff]
    %v435 = vld [vmem:[#allocation10] sm:$0xf]
    %v436 = vld [vmem:[#allocation10 + $0x4] sm:$0xf]
    %v437 = vld [vmem:[#allocation10 + $0x8] sm:$0xf]
    %v438 = vld [vmem:[#allocation10 + $0xc] sm:$0xf]
    %v439 = vld [vmem:[#allocation11] sm:$0xf]
    %v440 = vld [vmem:[#allocation11 + $0x4] sm:$0xf]
    %v441 = vld [vmem:[#allocation11 + $0x8] sm:$0xf]
    %v442 = vld [vmem:[#allocation11 + $0xc] sm:$0xf]
    %v443 = vld [vmem:[%s9] sm:$0xf]
    %v444 = vld [vmem:[%s9 + $0x4] sm:$0xf]
    %v445 = vld [vmem:[%s9 + $0x8] sm:$0xf]
    %v446 = vld [vmem:[%s9 + $0xc] sm:$0xf]
    %v447 = vld [vmem:[#allocation16] sm:$0xf]
    %v448 = vld [vmem:[#allocation16 + $0x4] sm:$0xf]
    %v449 = vld [vmem:[#allocation16 + $0x8] sm:$0xf]
    %v450 = vld [vmem:[#allocation16 + $0xc] sm:$0xf]
    %v451 = vld [vmem:[%s13] sm:$0x3]
    %v452 = vlaneseq
    %v453 = vshrl.u32 %v452, 7
    %v454 = vsub.s32 0, %v453
    %v455 = vrot.slane %v451, %v454
    %v456 = vlaneseq
    %v457 = vshrl.u32 %v456, 7
    %v458 = vsub.s32 1, %v457
    %v459 = vrot.slane %v451, %v458
    %s460 = sld [smem:[#allocation4]]
    // While loop
    $region114: #{tpu_custom_call.1} parent=1 // loop_pre_header
      _
    $region115: #{tpu_custom_call.1} parent=1 // loop_header
      %s462 = sphi 0, %s464
      %p463 = scmp.ge.s32.totalorder %s462, %s460
      %v467 = vphi %v455, %v862
      %v468 = vphi %v455, %v864
      %v469 = vphi %v459, %v870
      %v470 = vphi %v459, %v872
    $region116: #{tpu_custom_call.1} parent=1 // loop_header_branch
      %466 = sbr.rel (%p463) target = $region120
    $region117: #{tpu_custom_call.1} parent=1 // loop_body
      %s471 = ssub.s32 %s460, 1
      %s472 = ssub.s32 %s471, %s462
      %s473 = smul.addr %s462, 8
      %s474 = scalar_lea.vmem [#allocation2], %s473
      %v475 = vld [vmem:[%s474] sm:$0xff]
      %s476 = smul.addr %s472, 8
      %s477 = scalar_lea.vmem [#allocation2], %s476
      %v478 = vld [vmem:[%s477] sm:$0xff]
      %v483 = vunpack.c.l.b16 %v435
      %v484 = vunpack.c.l.b16 %v436
      %v485 = vunpack.c.l.b16 %v437
      %v486 = vunpack.c.l.b16 %v438
      %v487 = vpack.c.b16 %v484, %v483
      %v488 = vpack.c.b16 %v486, %v485
      %v492 = vsel %vm260, %v475, 0
      %494 = vmatprep.subr.bf16.mxu0 0
      %495 = vmatpush1.bf16.msra.mxu0 %v487
      %496 = vmatprep.subr.bf16.mxu0 0
      %497 = vmatpush1.bf16.msra.mxu0 %v488
      %498 = vmatprep.subr.bf16.mxu0 0
      %499 = vmatpush1.bf16.msra.mxu0 0
      %500 = vmatprep.subr.bf16.mxu0 0
      %501 = vmatpush1.bf16.msra.mxu0 0
      %502 = vmatprep.subr.bf16.mxu0 0
      %503 = vmatpush1.bf16.msra.mxu0 0
      %504 = vmatprep.subr.bf16.mxu0 0
      %505 = vmatpush1.bf16.msra.mxu0 0
      %506 = vmatprep.subr.bf16.mxu0 0
      %507 = vmatpush1.bf16.msra.mxu0 0
      %508 = vmatprep.subr.bf16.mxu0 0
      %509 = vmatpush1.bf16.msra.mxu0 0
      %510 = vmatprep.subr.bf16.mxu0 0
      %511 = vmatpush1.bf16.msra.mxu0 0
      %512 = vmatprep.subr.bf16.mxu0 0
      %513 = vmatpush1.bf16.msra.mxu0 0
      %514 = vmatprep.subr.bf16.mxu0 0
      %515 = vmatpush1.bf16.msra.mxu0 0
      %516 = vmatprep.subr.bf16.mxu0 0
      %517 = vmatpush1.bf16.msra.mxu0 0
      %518 = vmatprep.subr.bf16.mxu0 0
      %519 = vmatpush1.bf16.msra.mxu0 0
      %520 = vmatprep.subr.bf16.mxu0 0
      %521 = vmatpush1.bf16.msra.mxu0 0
      %522 = vmatprep.subr.bf16.mxu0 0
      %523 = vmatpush1.bf16.msra.mxu0 0
      %524 = vmatprep.subr.bf16.mxu0 0
      %525 = vmatpush1.bf16.msra.mxu0 0
      %526 = vmatprep.mubr.bf16.mxu0 0
      %527 = vmatmul.mubr.bf16.gmra.mrb[0].mxu0 %v492
      %v528 = vpop.f32.mrb[0].mxu0
      %v529 = vadd.f32 %v409, %v528
      %v530 = vpop.f32.mrb[0].mxu0
      %v531 = vpop.f32.mrb[0].mxu0
      %v532 = vadd.f32 %v409, %v531
      %v533 = vpop.f32.mrb[0].mxu0
      %534 = vdwg.mxu0
      %v535 = vpack.c.bf16 %v468, %v467
      %v540 = vunpack.c.l.b16 %v439
      %v541 = vunpack.c.l.b16 %v440
      %v542 = vunpack.c.l.b16 %v441
      %v543 = vunpack.c.l.b16 %v442
      %v544 = vpack.c.b16 %v541, %v540
      %v545 = vpack.c.b16 %v543, %v542
      %v549 = vsel %vm260, %v535, 0
      %551 = vmatprep.subr.bf16.mxu0 0
      %552 = vmatpush1.bf16.msra.mxu0 %v544
      %553 = vmatprep.subr.bf16.mxu0 0
      %554 = vmatpush1.bf16.msra.mxu0 %v545
      %555 = vmatprep.subr.bf16.mxu0 0
      %556 = vmatpush1.bf16.msra.mxu0 0
      %557 = vmatprep.subr.bf16.mxu0 0
      %558 = vmatpush1.bf16.msra.mxu0 0
      %559 = vmatprep.subr.bf16.mxu0 0
      %560 = vmatpush1.bf16.msra.mxu0 0
      %561 = vmatprep.subr.bf16.mxu0 0
      %562 = vmatpush1.bf16.msra.mxu0 0
      %563 = vmatprep.subr.bf16.mxu0 0
      %564 = vmatpush1.bf16.msra.mxu0 0
      %565 = vmatprep.subr.bf16.mxu0 0
      %566 = vmatpush1.bf16.msra.mxu0 0
      %567 = vmatprep.subr.bf16.mxu0 0
      %568 = vmatpush1.bf16.msra.mxu0 0
      %569 = vmatprep.subr.bf16.mxu0 0
      %570 = vmatpush1.bf16.msra.mxu0 0
      %571 = vmatprep.subr.bf16.mxu0 0
      %572 = vmatpush1.bf16.msra.mxu0 0
      %573 = vmatprep.subr.bf16.mxu0 0
      %574 = vmatpush1.bf16.msra.mxu0 0
      %575 = vmatprep.subr.bf16.mxu0 0
      %576 = vmatpush1.bf16.msra.mxu0 0
      %577 = vmatprep.subr.bf16.mxu0 0
      %578 = vmatpush1.bf16.msra.mxu0 0
      %579 = vmatprep.subr.bf16.mxu0 0
      %580 = vmatpush1.bf16.msra.mxu0 0
      %581 = vmatprep.subr.bf16.mxu0 0
      %582 = vmatpush1.bf16.msra.mxu0 0
      %583 = vmatprep.mubr.bf16.mxu0 0
      %584 = vmatmul.mubr.bf16.gmra.mrb[0].mxu0 %v549
      %v585 = vpop.f32.mrb[0].mxu0
      %v586 = vadd.f32 0.0, %v585
      %v587 = vpop.f32.mrb[0].mxu0
      %v588 = vpop.f32.mrb[0].mxu0
      %v589 = vadd.f32 0.0, %v588
      %v590 = vpop.f32.mrb[0].mxu0
      %591 = vdwg.mxu0
      %v592 = vadd.f32 %v529, %v586
      %v593 = vadd.f32 %v532, %v589
      %v594 = vxor.u32 %v592, 2147483648
      %v595 = vxor.u32 %v593, 2147483648
      %v596 = vmul.f32 %v594, 1.442695
      %v597 = vpow.pop %v596
      %v598 = vmul.f32 %v595, 1.442695
      %v599 = vpow.pop %v598
      %v600 = vadd.f32 %v597, 1.0
      %v601 = vadd.f32 %v599, 1.0
      %v602 = vrcp.pop %v600
      %v603 = vmul.f32 1.0, %v602
      %v604 = vrcp.pop %v601
      %v605 = vmul.f32 1.0, %v604
      %v606 = vadd.f32 %v586, %v425
      %v607 = vadd.f32 %v589, %v425
      %610 = vrot.lane.b32.xlu0 %v606, 64
      %v611 = vpop.permute.xlu0 %610
      %612 = vrot.lane.b32.xlu0 %v607, 64
      %v613 = vpop.permute.xlu0 %612
      %v616 = vmul.f32 %v603, %v611
      %v617 = vmul.f32 %v605, %v613
      %620 = vrot.lane.b32.xlu0 %v616, 64
      %v621 = vpop.permute.xlu0 %620
      %622 = vrot.lane.b32.xlu0 %v617, 64
      %v623 = vpop.permute.xlu0 %622
      %v626 = vadd.f32 %v529, %v621
      %v627 = vadd.f32 %v532, %v623
      %v628 = vtanh.pop %v626
      %v629 = vtanh.pop %v627
      %v630 = vsub.f32 1.0, %v603
      %v631 = vsub.f32 1.0, %v605
      %634 = vrot.lane.b32.xlu0 %v628, 96
      %v635 = vpop.permute.xlu0 %634
      %636 = vrot.lane.b32.xlu0 %v629, 96
      %v637 = vpop.permute.xlu0 %636
      %v640 = vmul.f32 %v630, %v635
      %v641 = vmul.f32 %v631, %v637
      %644 = vrot.lane.b32.xlu0 %v467, 32
      %v645 = vpop.permute.xlu0 %644
      %646 = vrot.lane.b32.xlu0 %v468, 32
      %v647 = vpop.permute.xlu0 %646
      %v650 = vmul.f32 %v603, %v645
      %v651 = vmul.f32 %v605, %v647
      %v652 = vadd.f32 %v640, %v650
      %v653 = vadd.f32 %v641, %v651
      %v658 = vunpack.c.l.b16 %v443
      %v659 = vunpack.c.l.b16 %v444
      %v660 = vunpack.c.l.b16 %v445
      %v661 = vunpack.c.l.b16 %v446
      %v662 = vpack.c.b16 %v659, %v658
      %v663 = vpack.c.b16 %v661, %v660
      %v667 = vsel %vm260, %v478, 0
      %669 = vmatprep.subr.bf16.mxu0 0
      %670 = vmatpush1.bf16.msra.mxu0 %v662
      %671 = vmatprep.subr.bf16.mxu0 0
      %672 = vmatpush1.bf16.msra.mxu0 %v663
      %673 = vmatprep.subr.bf16.mxu0 0
      %674 = vmatpush1.bf16.msra.mxu0 0
      %675 = vmatprep.subr.bf16.mxu0 0
      %676 = vmatpush1.bf16.msra.mxu0 0
      %677 = vmatprep.subr.bf16.mxu0 0
      %678 = vmatpush1.bf16.msra.mxu0 0
      %679 = vmatprep.subr.bf16.mxu0 0
      %680 = vmatpush1.bf16.msra.mxu0 0
      %681 = vmatprep.subr.bf16.mxu0 0
      %682 = vmatpush1.bf16.msra.mxu0 0
      %683 = vmatprep.subr.bf16.mxu0 0
      %684 = vmatpush1.bf16.msra.mxu0 0
      %685 = vmatprep.subr.bf16.mxu0 0
      %686 = vmatpush1.bf16.msra.mxu0 0
      %687 = vmatprep.subr.bf16.mxu0 0
      %688 = vmatpush1.bf16.msra.mxu0 0
      %689 = vmatprep.subr.bf16.mxu0 0
      %690 = vmatpush1.bf16.msra.mxu0 0
      %691 = vmatprep.subr.bf16.mxu0 0
      %692 = vmatpush1.bf16.msra.mxu0 0
      %693 = vmatprep.subr.bf16.mxu0 0
      %694 = vmatpush1.bf16.msra.mxu0 0
      %695 = vmatprep.subr.bf16.mxu0 0
      %696 = vmatpush1.bf16.msra.mxu0 0
      %697 = vmatprep.subr.bf16.mxu0 0
      %698 = vmatpush1.bf16.msra.mxu0 0
      %699 = vmatprep.subr.bf16.mxu0 0
      %700 = vmatpush1.bf16.msra.mxu0 0
      %701 = vmatprep.mubr.bf16.mxu0 0
      %702 = vmatmul.mubr.bf16.gmra.mrb[0].mxu0 %v667
      %v703 = vpop.f32.mrb[0].mxu0
      %v704 = vadd.f32 %v419, %v703
      %v705 = vpop.f32.mrb[0].mxu0
      %v706 = vpop.f32.mrb[0].mxu0
      %v707 = vadd.f32 %v419, %v706
      %v708 = vpop.f32.mrb[0].mxu0
      %709 = vdwg.mxu0
      %v710 = vpack.c.bf16 %v470, %v469
      %v715 = vunpack.c.l.b16 %v447
      %v716 = vunpack.c.l.b16 %v448
      %v717 = vunpack.c.l.b16 %v449
      %v718 = vunpack.c.l.b16 %v450
      %v719 = vpack.c.b16 %v716, %v715
      %v720 = vpack.c.b16 %v718, %v717
      %v724 = vsel %vm260, %v710, 0
      %726 = vmatprep.subr.bf16.mxu0 0
      %727 = vmatpush1.bf16.msra.mxu0 %v719
      %728 = vmatprep.subr.bf16.mxu0 0
      %729 = vmatpush1.bf16.msra.mxu0 %v720
      %730 = vmatprep.subr.bf16.mxu0 0
      %731 = vmatpush1.bf16.msra.mxu0 0
      %732 = vmatprep.subr.bf16.mxu0 0
      %733 = vmatpush1.bf16.msra.mxu0 0
      %734 = vmatprep.subr.bf16.mxu0 0
      %735 = vmatpush1.bf16.msra.mxu0 0
      %736 = vmatprep.subr.bf16.mxu0 0
      %737 = vmatpush1.bf16.msra.mxu0 0
      %738 = vmatprep.subr.bf16.mxu0 0
      %739 = vmatpush1.bf16.msra.mxu0 0
      %740 = vmatprep.subr.bf16.mxu0 0
      %741 = vmatpush1.bf16.msra.mxu0 0
      %742 = vmatprep.subr.bf16.mxu0 0
      %743 = vmatpush1.bf16.msra.mxu0 0
      %744 = vmatprep.subr.bf16.mxu0 0
      %745 = vmatpush1.bf16.msra.mxu0 0
      %746 = vmatprep.subr.bf16.mxu0 0
      %747 = vmatpush1.bf16.msra.mxu0 0
      %748 = vmatprep.subr.bf16.mxu0 0
      %749 = vmatpush1.bf16.msra.mxu0 0
      %750 = vmatprep.subr.bf16.mxu0 0
      %751 = vmatpush1.bf16.msra.mxu0 0
      %752 = vmatprep.subr.bf16.mxu0 0
      %753 = vmatpush1.bf16.msra.mxu0 0
      %754 = vmatprep.subr.bf16.mxu0 0
      %755 = vmatpush1.bf16.msra.mxu0 0
      %756 = vmatprep.subr.bf16.mxu0 0
      %757 = vmatpush1.bf16.msra.mxu0 0
      %758 = vmatprep.mubr.bf16.mxu0 0
      %759 = vmatmul.mubr.bf16.gmra.mrb[0].mxu0 %v724
      %v760 = vpop.f32.mrb[0].mxu0
      %v761 = vadd.f32 0.0, %v760
      %v762 = vpop.f32.mrb[0].mxu0
      %v763 = vpop.f32.mrb[0].mxu0
      %v764 = vadd.f32 0.0, %v763
      %v765 = vpop.f32.mrb[0].mxu0
      %766 = vdwg.mxu0
      %v767 = vadd.f32 %v704, %v761
      %v768 = vadd.f32 %v707, %v764
      %v769 = vxor.u32 %v767, 2147483648
      %v770 = vxor.u32 %v768, 2147483648
      %v771 = vmul.f32 %v769, 1.442695
      %v772 = vpow.pop %v771
      %v773 = vmul.f32 %v770, 1.442695
      %v774 = vpow.pop %v773
      %v775 = vadd.f32 %v772, 1.0
      %v776 = vadd.f32 %v774, 1.0
      %v777 = vrcp.pop %v775
      %v778 = vmul.f32 1.0, %v777
      %v779 = vrcp.pop %v776
      %v780 = vmul.f32 1.0, %v779
      %v781 = vadd.f32 %v761, %v431
      %v782 = vadd.f32 %v764, %v431
      %785 = vrot.lane.b32.xlu0 %v781, 64
      %v786 = vpop.permute.xlu0 %785
      %787 = vrot.lane.b32.xlu0 %v782, 64
      %v788 = vpop.permute.xlu0 %787
      %v791 = vmul.f32 %v778, %v786
      %v792 = vmul.f32 %v780, %v788
      %795 = vrot.lane.b32.xlu0 %v791, 64
      %v796 = vpop.permute.xlu0 %795
      %797 = vrot.lane.b32.xlu0 %v792, 64
      %v798 = vpop.permute.xlu0 %797
      %v801 = vadd.f32 %v704, %v796
      %v802 = vadd.f32 %v707, %v798
      %v803 = vtanh.pop %v801
      %v804 = vtanh.pop %v802
      %v805 = vsub.f32 1.0, %v778
      %v806 = vsub.f32 1.0, %v780
      %809 = vrot.lane.b32.xlu0 %v803, 96
      %v810 = vpop.permute.xlu0 %809
      %811 = vrot.lane.b32.xlu0 %v804, 96
      %v812 = vpop.permute.xlu0 %811
      %v815 = vmul.f32 %v805, %v810
      %v816 = vmul.f32 %v806, %v812
      %819 = vrot.lane.b32.xlu0 %v469, 32
      %v820 = vpop.permute.xlu0 %819
      %821 = vrot.lane.b32.xlu0 %v470, 32
      %v822 = vpop.permute.xlu0 %821
      %v825 = vmul.f32 %v778, %v820
      %v826 = vmul.f32 %v780, %v822
      %v827 = vadd.f32 %v815, %v825
      %v828 = vadd.f32 %v816, %v826
      %v829 = vstv %s462
      %vm830 = vcmp.lt.s32.totalorder %v829, %v433
      %vm831 = vcmp.lt.s32.totalorder %v829, %v434
      %v832 = vsel %vm830, 1, 0
      %v833 = vsel %vm831, 1, 0
      %834 = vset.pattern.permute.xlu0 0
      %835 = vperm.xlu0 %834, %v832
      %v836 = vpop.permute.xlu0 %835
      %837 = vset.pattern.permute.xlu0 0
      %838 = vperm.xlu0 %837, %v833
      %v839 = vpop.permute.xlu0 %838
      %vm840 = vcmp.eq.s32.totalorder %v836, 1
      %vm841 = vcmp.eq.s32.totalorder %v839, 1
      %v842 = vsel %vm840, %v652, %v645
      %v843 = vsel %vm841, %v653, %v647
      %v844 = vstv %s472
      %vm845 = vcmp.lt.s32.totalorder %v844, %v433
      %vm846 = vcmp.lt.s32.totalorder %v844, %v434
      %v847 = vsel %vm845, 1, 0
      %v848 = vsel %vm846, 1, 0
      %849 = vset.pattern.permute.xlu0 0
      %850 = vperm.xlu0 %849, %v847
      %v851 = vpop.permute.xlu0 %850
      %852 = vset.pattern.permute.xlu0 0
      %853 = vperm.xlu0 %852, %v848
      %v854 = vpop.permute.xlu0 %853
      %vm855 = vcmp.eq.s32.totalorder %v851, 1
      %vm856 = vcmp.eq.s32.totalorder %v854, 1
      %v857 = vsel %vm855, %v827, %v820
      %v858 = vsel %vm856, %v828, %v822
      %861 = vrot.lane.b32.xlu0 %v842, 96
      %v862 = vpop.permute.xlu0 %861
      %863 = vrot.lane.b32.xlu0 %v843, 96
      %v864 = vpop.permute.xlu0 %863
      %869 = vrot.lane.b32.xlu0 %v857, 96
      %v870 = vpop.permute.xlu0 %869
      %871 = vrot.lane.b32.xlu0 %v858, 96
      %v872 = vpop.permute.xlu0 %871
    $region118: #{tpu_custom_call.1} parent=1 // loop_footer
      %s464 = sadd.s32 %s462, 1
    $region119: #{tpu_custom_call.1} parent=1 // loop_footer_branch
      %461 = sbr.rel target = $region115
    $region120: #{tpu_custom_call.1} parent=1 // loop_exit
      _
    %877 = vrot.lane.b32.xlu0 %v469, 32
    %v878 = vpop.permute.xlu0 %877
    %879 = vrot.lane.b32.xlu0 %v470, 32
    %v880 = vpop.permute.xlu0 %879
    %v883 = vsel %vm260, %v467, %v878
    %v884 = vsel %vm260, %v468, %v880
    %v885 = vpack.c.bf16 %v884, %v883
    %v886 = vld [vmem:[%s14] sm:$0xf]
    %v887 = vld [vmem:[%s14 + $0x4] sm:$0xf]
    %v888 = vld [vmem:[%s14 + $0x8] sm:$0xf]
    %v889 = vld [vmem:[%s14 + $0xc] sm:$0xf]
    %v890 = vld [vmem:[%s14 + $0x10] sm:$0xf]
    %v891 = vld [vmem:[%s14 + $0x14] sm:$0xf]
    %v892 = vld [vmem:[%s14 + $0x18] sm:$0xf]
    %v893 = vld [vmem:[%s14 + $0x1c] sm:$0xf]
    %v894 = vld [vmem:[%s15] sm:$0x1]
    %v896 = vlaneseq
    %v897 = vshrl.u32 %v896, 7
    %v898 = vsub.s32 0, %v897
    %v899 = vrot.slane %v894, %v898
    %v909 = vunpack.c.l.b16 %v886
    %v910 = vunpack.c.l.b16 %v887
    %v911 = vunpack.c.l.b16 %v888
    %v912 = vunpack.c.l.b16 %v889
    %v913 = vunpack.c.l.b16 %v890
    %v914 = vunpack.c.l.b16 %v891
    %v915 = vunpack.c.l.b16 %v892
    %v916 = vunpack.c.l.b16 %v893
    %v917 = vpack.c.b16 %v910, %v909
    %v918 = vpack.c.b16 %v912, %v911
    %v919 = vpack.c.b16 %v914, %v913
    %v920 = vpack.c.b16 %v916, %v915
    %vm925 = vcmask 523264
    %v927 = vsel %vm925, %v885, 0
    %929 = vmatprep.subr.bf16.mxu0 0
    %930 = vmatpush1.bf16.msra.mxu0 %v917
    %931 = vmatprep.subr.bf16.mxu0 0
    %932 = vmatpush1.bf16.msra.mxu0 %v918
    %933 = vmatprep.subr.bf16.mxu0 0
    %934 = vmatpush1.bf16.msra.mxu0 %v919
    %935 = vmatprep.subr.bf16.mxu0 0
    %936 = vmatpush1.bf16.msra.mxu0 %v920
    %937 = vmatprep.subr.bf16.mxu0 0
    %938 = vmatpush1.bf16.msra.mxu0 0
    %939 = vmatprep.subr.bf16.mxu0 0
    %940 = vmatpush1.bf16.msra.mxu0 0
    %941 = vmatprep.subr.bf16.mxu0 0
    %942 = vmatpush1.bf16.msra.mxu0 0
    %943 = vmatprep.subr.bf16.mxu0 0
    %944 = vmatpush1.bf16.msra.mxu0 0
    %945 = vmatprep.subr.bf16.mxu0 0
    %946 = vmatpush1.bf16.msra.mxu0 0
    %947 = vmatprep.subr.bf16.mxu0 0
    %948 = vmatpush1.bf16.msra.mxu0 0
    %949 = vmatprep.subr.bf16.mxu0 0
    %950 = vmatpush1.bf16.msra.mxu0 0
    %951 = vmatprep.subr.bf16.mxu0 0
    %952 = vmatpush1.bf16.msra.mxu0 0
    %953 = vmatprep.subr.bf16.mxu0 0
    %954 = vmatpush1.bf16.msra.mxu0 0
    %955 = vmatprep.subr.bf16.mxu0 0
    %956 = vmatpush1.bf16.msra.mxu0 0
    %957 = vmatprep.subr.bf16.mxu0 0
    %958 = vmatpush1.bf16.msra.mxu0 0
    %959 = vmatprep.subr.bf16.mxu0 0
    %960 = vmatpush1.bf16.msra.mxu0 0
    %961 = vmatprep.mubr.bf16.mxu0 0
    %962 = vmatmul.mubr.bf16.gmra.mrb[0].mxu0 %v927
    %v963 = vpop.f32.mrb[0].mxu0
    %v964 = vadd.f32 %v899, %v963
    %v965 = vpop.f32.mrb[0].mxu0
    %v966 = vpop.f32.mrb[0].mxu0
    %v967 = vadd.f32 %v899, %v966
    %v968 = vpop.f32.mrb[0].mxu0
    %969 = vdwg.mxu0
    %v970 = vsel %vm260, %v964, 0.0
    %971 = vadd.xlane.f32.xlu0 %v970
    %v972 = vpop.xlane.xlu0 %971
    %v973 = vsel %vm260, %v967, 0.0
    %974 = vadd.xlane.f32.xlu0 %v973
    %v975 = vpop.xlane.xlu0 %974
    %v976 = vrcp.pop 32.0
    %v977 = vmul.f32 %v972, %v976
    %v978 = vmul.f32 %v975, %v976
    %v979 = vsub.f32 %v964, %v977
    %v980 = vsub.f32 %v967, %v978
    %v981 = vmul.f32 %v979, %v979
    %v982 = vmul.f32 %v980, %v980
    %v983 = vsel %vm260, %v981, 0.0
    %984 = vadd.xlane.f32.xlu0 %v983
    %v985 = vpop.xlane.xlu0 %984
    %v986 = vsel %vm260, %v982, 0.0
    %987 = vadd.xlane.f32.xlu0 %v986
    %v988 = vpop.xlane.xlu0 %987
    %v989 = vmul.f32 %v985, %v976
    %v990 = vmul.f32 %v988, %v976
    %v991 = vadd.f32 %v989, 1e-05
    %v992 = vadd.f32 %v990, 1e-05
    %v993 = vrsqrt.pop %v991
    %v994 = vrsqrt.pop %v992
    %v995 = vmul.f32 %v979, %v993
    %v996 = vmul.f32 %v980, %v994
    %v997 = vld [vmem:[%s16] sm:$0x1]
    %v999 = vlaneseq
    %v1000 = vshrl.u32 %v999, 7
    %v1001 = vsub.s32 0, %v1000
    %v1002 = vrot.slane %v997, %v1001
    %v1004 = vmul.f32 %v995, %v1002
    %v1005 = vmul.f32 %v996, %v1002
    %v1006 = vld [vmem:[%s17] sm:$0x1]
    %v1008 = vlaneseq
    %v1009 = vshrl.u32 %v1008, 7
    %v1010 = vsub.s32 0, %v1009
    %v1011 = vrot.slane %v1006, %v1010
    %v1013 = vadd.f32 %v1004, %v1011
    %v1014 = vadd.f32 %v1005, %v1011
    %vm1015 = vcmp.gt.f32.partialorder %v1013, 0.0
    %vm1016 = vcmp.gt.f32.partialorder %v1014, 0.0
    %v1017 = vmul.f32 %v1013, 0.2
    %v1018 = vmul.f32 %v1014, 0.2
    %v1019 = vsel %vm1015, %v1013, %v1017
    %v1020 = vsel %vm1016, %v1014, %v1018
    %v1021 = vpack.c.bf16 %v1020, %v1019
    %v1022 = vld [vmem:[%s18] sm:$0xf]
    %v1023 = vld [vmem:[%s18 + $0x4] sm:$0xf]
    %v1024 = vld [vmem:[%s18 + $0x8] sm:$0xf]
    %v1025 = vld [vmem:[%s18 + $0xc] sm:$0xf]
    %v1026 = vld [vmem:[%s19] sm:$0x1]
    %v1028 = vlaneseq
    %v1029 = vshrl.u32 %v1028, 7
    %v1030 = vsub.s32 0, %v1029
    %v1031 = vrot.slane %v1026, %v1030
    %v1037 = vunpack.c.l.b16 %v1022
    %v1038 = vunpack.c.l.b16 %v1023
    %v1039 = vunpack.c.l.b16 %v1024
    %v1040 = vunpack.c.l.b16 %v1025
    %v1041 = vpack.c.b16 %v1038, %v1037
    %v1042 = vpack.c.b16 %v1040, %v1039
    %v1046 = vsel %vm260, %v1021, 0
    %1048 = vmatprep.subr.bf16.mxu0 0
    %1049 = vmatpush1.bf16.msra.mxu0 %v1041
    %1050 = vmatprep.subr.bf16.mxu0 0
    %1051 = vmatpush1.bf16.msra.mxu0 %v1042
    %1052 = vmatprep.subr.bf16.mxu0 0
    %1053 = vmatpush1.bf16.msra.mxu0 0
    %1054 = vmatprep.subr.bf16.mxu0 0
    %1055 = vmatpush1.bf16.msra.mxu0 0
    %1056 = vmatprep.subr.bf16.mxu0 0
    %1057 = vmatpush1.bf16.msra.mxu0 0
    %1058 = vmatprep.subr.bf16.mxu0 0
    %1059 = vmatpush1.bf16.msra.mxu0 0
    %1060 = vmatprep.subr.bf16.mxu0 0
    %1061 = vmatpush1.bf16.msra.mxu0 0
    %1062 = vmatprep.subr.bf16.mxu0 0
    %1063 = vmatpush1.bf16.msra.mxu0 0
    %1064 = vmatprep.subr.bf16.mxu0 0
    %1065 = vmatpush1.bf16.msra.mxu0 0
    %1066 = vmatprep.subr.bf16.mxu0 0
    %1067 = vmatpush1.bf16.msra.mxu0 0
    %1068 = vmatprep.subr.bf16.mxu0 0
    %1069 = vmatpush1.bf16.msra.mxu0 0
    %1070 = vmatprep.subr.bf16.mxu0 0
    %1071 = vmatpush1.bf16.msra.mxu0 0
    %1072 = vmatprep.subr.bf16.mxu0 0
    %1073 = vmatpush1.bf16.msra.mxu0 0
    %1074 = vmatprep.subr.bf16.mxu0 0
    %1075 = vmatpush1.bf16.msra.mxu0 0
    %1076 = vmatprep.subr.bf16.mxu0 0
    %1077 = vmatpush1.bf16.msra.mxu0 0
    %1078 = vmatprep.subr.bf16.mxu0 0
    %1079 = vmatpush1.bf16.msra.mxu0 0
    %1080 = vmatprep.mubr.bf16.mxu0 0
    %1081 = vmatmul.mubr.bf16.gmra.mrb[0].mxu0 %v1046
    %v1082 = vpop.f32.mrb[0].mxu0
    %v1083 = vadd.f32 %v1031, %v1082
    %v1084 = vpop.f32.mrb[0].mxu0
    %v1085 = vpop.f32.mrb[0].mxu0
    %v1086 = vadd.f32 %v1031, %v1085
    %v1087 = vpop.f32.mrb[0].mxu0
    %1088 = vdwg.mxu0
    %1089 = vst.msk [vmem:[#allocation20] sm:$0xff] %vm260, %v1083
    %1090 = vst.msk [vmem:[#allocation20 + $0x8] sm:$0xff] %vm260, %v1086
    // Predicated region
    $region121: #{tpu_custom_call.1} parent=1 // pred_check
      _
    $region122: #{tpu_custom_call.1} parent=1 // pred_check_branch
      %1092 = sbr.rel (0) target = $region124
    $region123: #{tpu_custom_call.1} parent=1 // pred_region
      %s1094 = ssub.s32 256, 256
      %1095 = vsyncadd [#allocation7], %s1094
      %s1096 = sshll.u32 [#allocation20], 4
      %s1097 = int_to_ptr.vmem [resolvable:$true] %s1096
      %1102 = dma.vmem_to_hbm [thread:$0]  %s1097, 256, %s20, [#allocation7], 128, 128, 8
    $region124: #{tpu_custom_call.1} parent=1 // pred_fallthru
      _
    // Predicated region
    $region125: #{tpu_custom_call.1} parent=1 // pred_check
      _
    $region126: #{tpu_custom_call.1} parent=1 // pred_check_branch
      %1104 = sbr.rel (0) target = $region128
    $region127: #{tpu_custom_call.1} parent=1 // pred_region
      %1105 = dma.done [#allocation7], 256
    $region128: #{tpu_custom_call.1} parent=1 // pred_fallthru
      _
    %1106 = vsyncpa [#allocation6], 1
    %1107 = vsyncpa [#allocation9], 1
    %1108 = vsyncpa [#allocation12], 1
    %1109 = vsyncpa [#allocation15], 1
    %1110 = vsyncpa [#allocation18], 1
    %1111 = vsyncpa [#allocation7], 1

</llo_original>
